<compile_context>
chip_gen: v7x
topology: tpu7x:2x2x1
jax: 0.10.0
libtpu: 0.0.40
codegen_flags: <defaults>
</compile_context>

<pallas_src>
import functools

import jax
import jax.numpy as jnp
from jax.experimental import pallas as pl
from jax.experimental.pallas import tpu as pltpu

EPS = 1e-6


def _crop_indices(T, train_period, infer_period):
    # Mirrors PyTorch exactly: float start/end, then int() truncation of both.
    start_f = T / 2 - T * (infer_period / train_period) / 2
    end_f = start_f + T * (infer_period / train_period)
    return int(start_f), int(end_f)


def att_head_kernel(p_ref, x_ref, w1_ref, b1_ref, waf_ref, baf_ref,
                    logits_ref, clip_ref, fs_ref, ta_ref,
                    *, batch_tile, ts, ncp):
    # p_ref: SMEM (1,) GeM exponent; x_ref: VMEM (F, batch_tile*Ts, C), time-cropped.
    p = p_ref[0]
    x = x_ref[...]

    # GeM over frequency (axis 0): mean_F(clamp(x,eps)^p)^(1/p).
    # x > 0 after the clamp, so pow is exp/log.
    xc = jnp.maximum(x, EPS)
    xp = jnp.exp(p * jnp.log(xc))
    pooled = jnp.mean(xp, axis=0)                       # (bt*Ts, C)
    pooled = jnp.exp(jnp.log(pooled) / p)               # (bt*Ts, C)

    # dense_layers (Dropout = identity in eval): Linear(C, 512) + ReLU.
    h = jnp.dot(pooled.astype(w1_ref.dtype), w1_ref[...],
                preferred_element_type=jnp.float32) + b1_ref[...]
    h = jnp.maximum(h, 0.0)                             # (bt*Ts, H) f32

    # Fused attention + fix_scale heads (both are 1x1 convs == one matmul with
    # the concatenated [wa | wf] weight).
    y = jnp.dot(h.astype(waf_ref.dtype), waf_ref[...],
                preferred_element_type=jnp.float32) + baf_ref[...]   # (bt*Ts, 2*NCp)
    ta = jnp.tanh(y[:, :ncp])                           # (bt*Ts, NCp)
    fs = y[:, ncp:]                                     # (bt*Ts, NCp)

    # Un-flatten the batch (leading-dim split; lane dim preserved).
    ta3 = ta.reshape(batch_tile, ts, ncp)
    fs3 = fs.reshape(batch_tile, ts, ncp)

    # Softmax over time (axis 1), per example / per class.
    m = jnp.max(ta3, axis=1, keepdims=True)
    e = jnp.exp(ta3 - m)
    denom = jnp.sum(e, axis=1, keepdims=True)
    att = e * pl.reciprocal(denom, approx=True)

    clip_ref[...] = jnp.sum(jax.nn.sigmoid(fs3) * att, axis=1, keepdims=True)  # (bt,1,NCp)
    logits_ref[...] = jnp.sum(fs3 * att, axis=1, keepdims=True)                # (bt,1,NCp)
    fs_ref[...] = fs3
    ta_ref[...] = ta3


def att_head_forward(x_nchw, params, *, train_period=15.0, infer_period=5.0,
                     matmul_dtype=jnp.float32, batch_tile=None):
    """x_nchw: (B, C, F, T) float32 (PyTorch NCHW). Returns PyTorch-convention outputs."""
    B, C, F, T = x_nchw.shape
    p, w1, b1, wa, ba, wf, bf = (params[k] for k in ("p", "w1", "b1", "wa", "ba", "wf", "bf"))
    H = w1.shape[1]
    NC = wa.shape[1]
    assert train_period >= infer_period

    start, end = _crop_indices(T, train_period, infer_period)
    Ts = end - start
    assert Ts >= 1

    if batch_tile is None:
        batch_tile = B          # whole batch in one kernel call (grid=(1,)); B//2 on v7x.
    assert B % batch_tile == 0
    grid = (B // batch_tile,)

    # Pad class dim to a multiple of 128 so output stores / MXU-N stay lane-dense.
    NCp = -(-NC // 128) * 128
    pad = ((0, 0), (0, NCp - NC))
    w_af = jnp.concatenate([jnp.pad(wa, pad), jnp.pad(wf, pad)], axis=1).astype(matmul_dtype)
    b_af = jnp.concatenate([jnp.pad(ba, pad), jnp.pad(bf, pad)], axis=1)     # f32 (1, 2*NCp)
    w1_m = w1.astype(matmul_dtype)

    # Crop the time window up front (valid: everything before the crop is pointwise in
    # time) and lay out as (F, B*Ts, C) in one fused XLA slice+transpose+reshape.
    x_c = x_nchw[:, :, :, start:end]                                   # (B, C, F, Ts)
    x_kern = jnp.transpose(x_c, (2, 0, 3, 1)).reshape(F, B * Ts, C)    # (F, B*Ts, C)

    kernel = functools.partial(att_head_kernel, batch_tile=batch_tile, ts=Ts, ncp=NCp)

    out_shape = (
        jax.ShapeDtypeStruct((B, 1, NCp), jnp.float32),    # logits
        jax.ShapeDtypeStruct((B, 1, NCp), jnp.float32),    # clipwise
        jax.ShapeDtypeStruct((B, Ts, NCp), jnp.float32),   # fix_scale(feat_crop), time-major
        jax.ShapeDtypeStruct((B, Ts, NCp), jnp.float32),   # time_att_crop, time-major
    )

    wspec = lambda shape: pl.BlockSpec(shape, lambda g: (0, 0))

    logits_p, clip_p, fs_p, ta_p = pl.pallas_call(
        kernel,
        out_shape=out_shape,
        grid_spec=pltpu.PrefetchScalarGridSpec(
            num_scalar_prefetch=0,
            grid=grid,
            in_specs=[
                pl.BlockSpec(memory_space=pltpu.MemorySpace.SMEM),           # p (GeM exp.)
                pl.BlockSpec((F, batch_tile * Ts, C), lambda g: (0, g, 0)),  # x (cropped)
                wspec((C, H)),                                               # w1
                wspec((1, H)),                                               # b1
                wspec((H, 2 * NCp)),                                         # [wa | wf]
                wspec((1, 2 * NCp)),                                         # [ba | bf]
            ],
            out_specs=[
                pl.BlockSpec((batch_tile, 1, NCp), lambda g: (g, 0, 0)),
                pl.BlockSpec((batch_tile, 1, NCp), lambda g: (g, 0, 0)),
                pl.BlockSpec((batch_tile, Ts, NCp), lambda g: (g, 0, 0)),
                pl.BlockSpec((batch_tile, Ts, NCp), lambda g: (g, 0, 0)),
            ],
        ),
        compiler_params=pltpu.CompilerParams(dimension_semantics=("parallel",)),
    )(p, x_kern, w1_m, b1, w_af, b_af)

    # Slice off class padding; transpose fs/ta back to the PyTorch (B, NC, Ts) layout.
    logits = logits_p[:, 0, :NC]
    clipwise = clip_p[:, 0, :NC]
    fs = jnp.transpose(fs_p[:, :, :NC], (0, 2, 1))
    ta = jnp.transpose(ta_p[:, :, :NC], (0, 2, 1))
    return logits, clipwise, fs, ta


def att_head_reference(x_nchw, params, *, train_period=15.0, infer_period=5.0):
    """Pure-JAX reference mirroring the PyTorch forward (eval mode)."""
    p, w1, b1, wa, ba, wf, bf = (params[k] for k in ("p", "w1", "b1", "wa", "ba", "wf", "bf"))
    B, C, F, T = x_nchw.shape
    start, end = _crop_indices(T, train_period, infer_period)

    xc = jnp.maximum(x_nchw, EPS)
    pooled = jnp.mean(xc ** p[0], axis=2) ** (1.0 / p[0])    # (B, C, T)
    feat = jnp.transpose(pooled, (0, 2, 1))                  # (B, T, C)
    h = jax.nn.relu(feat @ w1 + b1)                          # (B, T, 512)
    ta_full = jnp.tanh(h @ wa + ba)                          # (B, T, NC)
    hs = h[:, start:end]
    ta = ta_full[:, start:end]
    fs = hs @ wf + bf                                        # (B, Ts, NC)
    att = jax.nn.softmax(ta, axis=1)
    clipwise = jnp.sum(jax.nn.sigmoid(fs) * att, axis=1)
    logits = jnp.sum(fs * att, axis=1)
    return logits, clipwise, jnp.transpose(fs, (0, 2, 1)), jnp.transpose(ta, (0, 2, 1))


if __name__ == "__main__":
    # Small shapes consistent with the module: Linear(in_chans, 512), num_class=397.
    B, C, F, T = 2, 32, 8, 24
    HIDDEN = 512
    NUM_CLASS = 397   # module default; padded to 512 lanes inside the wrapper

    key = jax.random.PRNGKey(0)
    kx, k1, k2, k3, k4, k5, k6 = jax.random.split(key, 7)

    # Input spectrogram-like feature, NCHW = (B, C, F, T).
    x = jax.random.uniform(kx, (B, C, F, T), jnp.float32, minval=0.0, maxval=1.0)

    params = {
        "p": jnp.array([3.0], jnp.float32),                                   # GeMFreq p
        "w1": 0.05 * jax.random.normal(k1, (C, HIDDEN), jnp.float32),         # Linear(C, 512)
        "b1": 0.05 * jax.random.normal(k2, (1, HIDDEN), jnp.float32),
        "wa": 0.05 * jax.random.normal(k3, (HIDDEN, NUM_CLASS), jnp.float32), # attention 1x1
        "ba": 0.05 * jax.random.normal(k4, (1, NUM_CLASS), jnp.float32),
        "wf": 0.05 * jax.random.normal(k5, (HIDDEN, NUM_CLASS), jnp.float32), # fix_scale 1x1
        "bf": 0.05 * jax.random.normal(k6, (1, NUM_CLASS), jnp.float32),
    }

    refs = att_head_reference(x, params)

    # f32 matmul path (default).
    outs = jax.block_until_ready(att_head_forward(x, params))
    for o, r in zip(outs, refs):
        assert o.shape == r.shape, (o.shape, r.shape)
        assert jnp.allclose(o, r, atol=1e-3, rtol=1e-3), float(jnp.max(jnp.abs(o - r)))

    # bf16 matmul-input path (v6e/v7x MXU); elementwise math stays f32.
    outs_bf16 = jax.block_until_ready(
        att_head_forward(x, params, matmul_dtype=jnp.bfloat16))
    for o, r in zip(outs_bf16, refs):
        assert o.shape == r.shape, (o.shape, r.shape)
        assert jnp.allclose(o, r, atol=5e-2, rtol=5e-2), float(jnp.max(jnp.abs(o - r)))

    print("KERNEL_OK")
</pallas_src>

<mosaic_0001>
module attributes {stable_mosaic.version = 11 : i64} {
  func.func @att_head_kernel(%arg0: i32, %arg1: memref<1xf32, #tpu.memory_space<smem>>, %arg2: memref<8x16x32xf32, #tpu.memory_space<vmem>>, %arg3: memref<32x512xf32, #tpu.memory_space<vmem>>, %arg4: memref<1x512xf32, #tpu.memory_space<vmem>>, %arg5: memref<512x1024xf32, #tpu.memory_space<vmem>>, %arg6: memref<1x1024xf32, #tpu.memory_space<vmem>>, %arg7: memref<2x1x512xf32, #tpu.memory_space<vmem>>, %arg8: memref<2x1x512xf32, #tpu.memory_space<vmem>>, %arg9: memref<2x8x512xf32, #tpu.memory_space<vmem>>, %arg10: memref<2x8x512xf32, #tpu.memory_space<vmem>>) attributes {dimension_semantics = [#tpu.dimension_semantics<parallel>], iteration_bounds = array<i64: 1>, scalar_prefetch = 0 : i64, scratch_operands = 0 : i64, tpu.core_type = #tpu.core_type<tc>, window_params = [{transform_indices = @transform_0, window_bounds = array<i64: 1>}, {transform_indices = @transform_1, window_bounds = array<i64: 8, 16, 32>}, {pipeline_mode = #tpu.pipeline_mode<synchronous>, transform_indices = @transform_2, window_bounds = array<i64: 32, 512>}, {pipeline_mode = #tpu.pipeline_mode<synchronous>, transform_indices = @transform_3, window_bounds = array<i64: 1, 512>}, {pipeline_mode = #tpu.pipeline_mode<synchronous>, transform_indices = @transform_4, window_bounds = array<i64: 512, 1024>}, {pipeline_mode = #tpu.pipeline_mode<synchronous>, transform_indices = @transform_5, window_bounds = array<i64: 1, 1024>}, {transform_indices = @transform_6, window_bounds = array<i64: 2, 1, 512>}, {transform_indices = @transform_7, window_bounds = array<i64: 2, 1, 512>}, {transform_indices = @transform_8, window_bounds = array<i64: 2, 8, 512>}, {transform_indices = @transform_9, window_bounds = array<i64: 2, 8, 512>}]} {
    %c0 = arith.constant 0 : index
    %0 = memref.load %arg1[%c0] : memref<1xf32, #tpu.memory_space<smem>>
    %c0_0 = arith.constant 0 : index
    %c0_1 = arith.constant 0 : index
    %c0_2 = arith.constant 0 : index
    %1 = vector.load %arg2[%c0_0, %c0_1, %c0_2] : memref<8x16x32xf32, #tpu.memory_space<vmem>>, vector<8x16x32xf32>
    %cst = arith.constant 9.99999997E-7 : f32
    %2 = vector.broadcast %cst : f32 to vector<8x16x32xf32>
    %3 = arith.maximumf %1, %2 : vector<8x16x32xf32>
    %4 = math.log %3 : vector<8x16x32xf32>
    %5 = vector.broadcast %0 : f32 to vector<8x16x32xf32>
    %6 = arith.mulf %5, %4 : vector<8x16x32xf32>
    %7 = math.exp %6 : vector<8x16x32xf32>
    %cst_3 = arith.constant dense<0.000000e+00> : vector<16x32xf32>
    %8 = vector.multi_reduction <add>, %7, %cst_3 [0] : vector<8x16x32xf32> to vector<16x32xf32>
    %cst_4 = arith.constant 8.000000e+00 : f32
    %9 = vector.broadcast %cst_4 : f32 to vector<16x32xf32>
    %10 = arith.divf %8, %9 : vector<16x32xf32>
    %11 = math.log %10 : vector<16x32xf32>
    %12 = vector.broadcast %0 : f32 to vector<16x32xf32>
    %13 = arith.divf %11, %12 : vector<16x32xf32>
    %14 = math.exp %13 : vector<16x32xf32>
    %c0_5 = arith.constant 0 : index
    %c0_6 = arith.constant 0 : index
    %15 = vector.load %arg3[%c0_5, %c0_6] : memref<32x512xf32, #tpu.memory_space<vmem>>, vector<32x512xf32>
    %cst_7 = arith.constant dense<0.000000e+00> : vector<16x512xf32>
    %16 = tpu.matmul %14, %15, %cst_7 {dimension_numbers = #tpu.dot_dimension_numbers<[1], [0], [0], [1], [0, 0, 1, 1], [], []>} : vector<16x32xf32>, vector<32x512xf32>, vector<16x512xf32> -> vector<16x512xf32>
    %c0_8 = arith.constant 0 : index
    %c0_9 = arith.constant 0 : index
    %17 = vector.load %arg4[%c0_8, %c0_9] : memref<1x512xf32, #tpu.memory_space<vmem>>, vector<1x512xf32>
    %18 = vector.broadcast %17 : vector<1x512xf32> to vector<16x512xf32>
    %19 = arith.addf %16, %18 : vector<16x512xf32>
    %cst_10 = arith.constant 0.000000e+00 : f32
    %20 = vector.broadcast %cst_10 : f32 to vector<16x512xf32>
    %21 = arith.maximumf %19, %20 : vector<16x512xf32>
    %c0_11 = arith.constant 0 : index
    %c0_12 = arith.constant 0 : index
    %22 = vector.load %arg5[%c0_11, %c0_12] : memref<512x1024xf32, #tpu.memory_space<vmem>>, vector<512x1024xf32>
    %cst_13 = arith.constant dense<0.000000e+00> : vector<16x1024xf32>
    %23 = tpu.matmul %21, %22, %cst_13 {dimension_numbers = #tpu.dot_dimension_numbers<[1], [0], [0], [1], [0, 0, 1, 1], [], []>} : vector<16x512xf32>, vector<512x1024xf32>, vector<16x1024xf32> -> vector<16x1024xf32>
    %c0_14 = arith.constant 0 : index
    %c0_15 = arith.constant 0 : index
    %24 = vector.load %arg6[%c0_14, %c0_15] : memref<1x1024xf32, #tpu.memory_space<vmem>>, vector<1x1024xf32>
    %25 = vector.broadcast %24 : vector<1x1024xf32> to vector<16x1024xf32>
    %26 = arith.addf %23, %25 : vector<16x1024xf32>
    %27 = vector.extract_strided_slice %26 {offsets = [0, 0], sizes = [16, 512], strides = [1, 1]} : vector<16x1024xf32> to vector<16x512xf32>
    %28 = math.tanh %27 : vector<16x512xf32>
    %29 = vector.extract_strided_slice %26 {offsets = [0, 512], sizes = [16, 512], strides = [1, 1]} : vector<16x1024xf32> to vector<16x512xf32>
    %30 = vector.shape_cast %28 : vector<16x512xf32> to vector<2x8x512xf32>
    %31 = vector.shape_cast %29 : vector<16x512xf32> to vector<2x8x512xf32>
    %cst_16 = arith.constant dense<0xFF800000> : vector<2x512xf32>
    %32 = vector.multi_reduction <maximumf>, %30, %cst_16 [1] : vector<2x8x512xf32> to vector<2x512xf32>
    %33 = vector.shape_cast %32 : vector<2x512xf32> to vector<2x1x512xf32>
    %34 = vector.broadcast %33 : vector<2x1x512xf32> to vector<2x8x512xf32>
    %35 = arith.subf %30, %34 : vector<2x8x512xf32>
    %36 = math.exp %35 : vector<2x8x512xf32>
    %cst_17 = arith.constant dense<0.000000e+00> : vector<2x512xf32>
    %37 = vector.multi_reduction <add>, %36, %cst_17 [1] : vector<2x8x512xf32> to vector<2x512xf32>
    %38 = vector.shape_cast %37 : vector<2x512xf32> to vector<2x1x512xf32>
    %39 = tpu.reciprocal %38 {approx = true} : vector<2x1x512xf32> -> vector<2x1x512xf32>
    %40 = vector.broadcast %39 : vector<2x1x512xf32> to vector<2x8x512xf32>
    %41 = arith.mulf %36, %40 : vector<2x8x512xf32>
    %42 = arith.negf %31 : vector<2x8x512xf32>
    %43 = math.exp %42 : vector<2x8x512xf32>
    %cst_18 = arith.constant 1.000000e+00 : f32
    %44 = vector.broadcast %cst_18 : f32 to vector<2x8x512xf32>
    %45 = arith.addf %44, %43 : vector<2x8x512xf32>
    %46 = arith.divf %44, %45 : vector<2x8x512xf32>
    %47 = arith.mulf %46, %41 : vector<2x8x512xf32>
    %cst_19 = arith.constant dense<0.000000e+00> : vector<2x512xf32>
    %48 = vector.multi_reduction <add>, %47, %cst_19 [1] : vector<2x8x512xf32> to vector<2x512xf32>
    %49 = vector.shape_cast %48 : vector<2x512xf32> to vector<2x1x512xf32>
    %c0_20 = arith.constant 0 : index
    %c0_21 = arith.constant 0 : index
    %c0_22 = arith.constant 0 : index
    %50 = vector.load %arg8[%c0_20, %c0_21, %c0_22] : memref<2x1x512xf32, #tpu.memory_space<vmem>>, vector<2x1x512xf32>
    tpu.vector_store %arg8[%c0_20, %c0_21, %c0_22], %49 {strides = array<i32>} : memref<2x1x512xf32, #tpu.memory_space<vmem>>, vector<2x1x512xf32>,
    %51 = arith.mulf %31, %41 : vector<2x8x512xf32>
    %cst_23 = arith.constant dense<0.000000e+00> : vector<2x512xf32>
    %52 = vector.multi_reduction <add>, %51, %cst_23 [1] : vector<2x8x512xf32> to vector<2x512xf32>
    %53 = vector.shape_cast %52 : vector<2x512xf32> to vector<2x1x512xf32>
    %c0_24 = arith.constant 0 : index
    %c0_25 = arith.constant 0 : index
    %c0_26 = arith.constant 0 : index
    %54 = vector.load %arg7[%c0_24, %c0_25, %c0_26] : memref<2x1x512xf32, #tpu.memory_space<vmem>>, vector<2x1x512xf32>
    tpu.vector_store %arg7[%c0_24, %c0_25, %c0_26], %53 {strides = array<i32>} : memref<2x1x512xf32, #tpu.memory_space<vmem>>, vector<2x1x512xf32>,
    %c0_27 = arith.constant 0 : index
    %c0_28 = arith.constant 0 : index
    %c0_29 = arith.constant 0 : index
    %55 = vector.load %arg9[%c0_27, %c0_28, %c0_29] : memref<2x8x512xf32, #tpu.memory_space<vmem>>, vector<2x8x512xf32>
    tpu.vector_store %arg9[%c0_27, %c0_28, %c0_29], %31 {strides = array<i32>} : memref<2x8x512xf32, #tpu.memory_space<vmem>>, vector<2x8x512xf32>,
    %c0_30 = arith.constant 0 : index
    %c0_31 = arith.constant 0 : index
    %c0_32 = arith.constant 0 : index
    %56 = vector.load %arg10[%c0_30, %c0_31, %c0_32] : memref<2x8x512xf32, #tpu.memory_space<vmem>>, vector<2x8x512xf32>
    tpu.vector_store %arg10[%c0_30, %c0_31, %c0_32], %30 {strides = array<i32>} : memref<2x8x512xf32, #tpu.memory_space<vmem>>, vector<2x8x512xf32>,
    return
  }
  func.func @transform_0(%arg0: i32) -> i32 {
    %c0_i32 = arith.constant 0 : i32
    %c0_i32_0 = arith.constant 0 : i32
    return %c0_i32 : i32
  }
  func.func @transform_1(%arg0: i32) -> (i32, i32, i32) {
    %c0_i32 = arith.constant 0 : i32
    %c0_i32_0 = arith.constant 0 : i32
    %c0_i32_1 = arith.constant 0 : i32
    return %c0_i32, %arg0, %c0_i32_0 : i32, i32, i32
  }
  func.func @transform_2(%arg0: i32) -> (i32, i32) {
    %c0_i32 = arith.constant 0 : i32
    %c0_i32_0 = arith.constant 0 : i32
    %c0_i32_1 = arith.constant 0 : i32
    return %c0_i32, %c0_i32_0 : i32, i32
  }
  func.func @transform_3(%arg0: i32) -> (i32, i32) {
    %c0_i32 = arith.constant 0 : i32
    %c0_i32_0 = arith.constant 0 : i32
    %c0_i32_1 = arith.constant 0 : i32
    return %c0_i32, %c0_i32_0 : i32, i32
  }
  func.func @transform_4(%arg0: i32) -> (i32, i32) {
    %c0_i32 = arith.constant 0 : i32
    %c0_i32_0 = arith.constant 0 : i32
    %c0_i32_1 = arith.constant 0 : i32
    return %c0_i32, %c0_i32_0 : i32, i32
  }
  func.func @transform_5(%arg0: i32) -> (i32, i32) {
    %c0_i32 = arith.constant 0 : i32
    %c0_i32_0 = arith.constant 0 : i32
    %c0_i32_1 = arith.constant 0 : i32
    return %c0_i32, %c0_i32_0 : i32, i32
  }
  func.func @transform_6(%arg0: i32) -> (i32, i32, i32) {
    %c0_i32 = arith.constant 0 : i32
    %c0_i32_0 = arith.constant 0 : i32
    %c0_i32_1 = arith.constant 0 : i32
    return %arg0, %c0_i32, %c0_i32_0 : i32, i32, i32
  }
  func.func @transform_7(%arg0: i32) -> (i32, i32, i32) {
    %c0_i32 = arith.constant 0 : i32
    %c0_i32_0 = arith.constant 0 : i32
    %c0_i32_1 = arith.constant 0 : i32
    return %arg0, %c0_i32, %c0_i32_0 : i32, i32, i32
  }
  func.func @transform_8(%arg0: i32) -> (i32, i32, i32) {
    %c0_i32 = arith.constant 0 : i32
    %c0_i32_0 = arith.constant 0 : i32
    %c0_i32_1 = arith.constant 0 : i32
    return %arg0, %c0_i32, %c0_i32_0 : i32, i32, i32
  }
  func.func @transform_9(%arg0: i32) -> (i32, i32, i32) {
    %c0_i32 = arith.constant 0 : i32
    %c0_i32_0 = arith.constant 0 : i32
    %c0_i32_1 = arith.constant 0 : i32
    return %arg0, %c0_i32, %c0_i32_0 : i32, i32, i32
  }
}

</mosaic_0001>

<llo_original>
// kernel: tpu_custom_call.1
$region0: #{tpu_custom_call.1}
  #allocation0 [shape = 'u32[]', space=smem, size = 0x4, offset = 0x4, fixed_abs, tag = 'smem constant byte address 0x4 - core index']
  #allocation1 [shape = 'u32[144,128]{1,0:T(1,128)}', space=vmem, size = 0x12000, scoped, tag = 'internal scratch']
  #allocation2 [shape = 'f32[1]{0:T(128)S(6)}', space=smem, size = 0x200, scoped, tag = 'scoped memory for tpu_custom_call.1']
  %s0 = inlined_call_operand.<no memory space> [shape: f32[1], index: 0, kind: input, shape index: {}]
  %s1 = inlined_call_operand.hbm [shape: f32[8,16,32], index: 1, kind: input, shape index: {}]
  %s2 = inlined_call_operand.hbm [shape: f32[32,512], index: 2, kind: input, shape index: {}]
  %s3 = inlined_call_operand.hbm [shape: f32[1,512], index: 3, kind: input, shape index: {}]
  %s4 = inlined_call_operand.hbm [shape: f32[512,1024], index: 4, kind: input, shape index: {}]
  %s5 = inlined_call_operand.hbm [shape: f32[1,1024], index: 5, kind: input, shape index: {}]
  %s6 = inlined_call_operand.hbm [shape: f32[2,1,512], index: 6, kind: output, shape index: {0}]
  %s7 = inlined_call_operand.hbm [shape: f32[2,1,512], index: 7, kind: output, shape index: {1}]
  %s8 = inlined_call_operand.hbm [shape: f32[2,8,512], index: 8, kind: output, shape index: {2}]
  %s9 = inlined_call_operand.hbm [shape: f32[2,8,512], index: 9, kind: output, shape index: {3}]
  %10 = xla_tuple %s6, %s7, %s8, %s9
  %s11 = sld [smem:[#allocation0]]
  $region78: #{tpu_custom_call.1} parent=0
    _
  %s13 = ssub.s32 1, %s11
  %s14 = scalar_select 0, %s13, %s11
  %15 = sst [smem:[#allocation2]] %s0
  $region1: #{tpu_custom_call.1} parent=0
    #allocation3 [shape = 'u8[65536]{0}', space=vmem, size = 0x10000, scoped, tag = 'input window, operand 1, single buffered']
    #allocation4 [shape = 's32[1]{0}', space=sflag, size = 0x4, scoped, tag = 'scoped memory for tpu_custom_call.1']
    #allocation5 [shape = 's32[1]{0}', space=sflag, size = 0x4, scoped, tag = 'scoped memory for tpu_custom_call.1']
    #allocation6 [shape = 'u8[65536]{0}', space=vmem, size = 0x10000, scoped, tag = 'input window, operand 2, single buffered']
    #allocation7 [shape = 's32[1]{0}', space=sflag, size = 0x4, scoped, tag = 'scoped memory for tpu_custom_call.1']
    #allocation8 [shape = 'u8[2048]{0}', space=vmem, size = 0x800, scoped, tag = 'input window, operand 3, single buffered']
    #allocation9 [shape = 'u8[2097152]{0}', space=vmem, size = 0x200000, scoped, tag = 'input window, operand 4, single buffered']
    #allocation10 [shape = 's32[1]{0}', space=sflag, size = 0x4, scoped, tag = 'scoped memory for tpu_custom_call.1']
    #allocation11 [shape = 'u8[4096]{0}', space=vmem, size = 0x1000, scoped, tag = 'input window, operand 5, single buffered']
    #allocation12 [shape = 'u8[4096]{0}', space=vmem, size = 0x1000, scoped, tag = 'output window, operand 0, single buffered']
    #allocation13 [shape = 'u8[4096]{0}', space=vmem, size = 0x1000, scoped, tag = 'output window, operand 1, single buffered']
    #allocation14 [shape = 's32[1]{0}', space=sflag, size = 0x4, scoped, tag = 'scoped memory for tpu_custom_call.1']
    #allocation15 [shape = 'u8[32768]{0}', space=vmem, size = 0x8000, scoped, tag = 'output window, operand 2, single buffered']
    #allocation16 [shape = 'u8[32768]{0}', space=vmem, size = 0x8000, scoped, tag = 'output window, operand 3, single buffered']
    #allocation17 [shape = 's32[1]{0}', space=sflag, size = 0x4, scoped, tag = 'scoped memory for tpu_custom_call.1']
    %16 = vsyncpa [#allocation4], 0
    %17 = vsyncpa [#allocation7], 0
    %18 = vsyncpa [#allocation10], 0
    %19 = vsyncpa [#allocation5], 0
    %20 = vsyncpa [#allocation14], 0
    %21 = vsyncpa [#allocation17], 0
    // Predicated region
    $region2: #{tpu_custom_call.1} parent=1 // pred_check
      _
    $region3: #{tpu_custom_call.1} parent=1 // pred_check_branch
      %23 = sbr.rel (0) target = $region5
    $region4: #{tpu_custom_call.1} parent=1 // pred_region
      _
    $region5: #{tpu_custom_call.1} parent=1 // pred_fallthru
      _
    // Predicated region
    $region6: #{tpu_custom_call.1} parent=1 // pred_check
      _
    $region7: #{tpu_custom_call.1} parent=1 // pred_check_branch
      %25 = sbr.rel (0) target = $region9
    $region8: #{tpu_custom_call.1} parent=1 // pred_region
      %s27 = ssub.s32 2048, 2048
      %28 = vsyncadd [#allocation4], %s27
      %s29 = sshll.u32 [#allocation3], 4
      %s30 = int_to_ptr.vmem [resolvable:$true] %s29
      %35 = dma.hbm_to_vmem [thread:$0]  %s1, 2048, %s30, [#allocation4], 128, 128, 8
    $region9: #{tpu_custom_call.1} parent=1 // pred_fallthru
      _
    // Predicated region
    $region10: #{tpu_custom_call.1} parent=1 // pred_check
      _
    $region11: #{tpu_custom_call.1} parent=1 // pred_check_branch
      %37 = sbr.rel (0) target = $region13
    $region12: #{tpu_custom_call.1} parent=1 // pred_region
      %s39 = ssub.s32 2048, 2048
      %40 = vsyncadd [#allocation7], %s39
      %s41 = sshll.u32 [#allocation6], 4
      %s42 = int_to_ptr.vmem [resolvable:$true] %s41
      %47 = dma.hbm_to_vmem [thread:$0]  %s2, 2048, %s42, [#allocation7], 512, 512, 32
    $region13: #{tpu_custom_call.1} parent=1 // pred_fallthru
      _
    // Predicated region
    $region14: #{tpu_custom_call.1} parent=1 // pred_check
      _
    $region15: #{tpu_custom_call.1} parent=1 // pred_check_branch
      %49 = sbr.rel (0) target = $region17
    $region16: #{tpu_custom_call.1} parent=1 // pred_region
      %s51 = ssub.s32 64, 64
      %52 = vsyncadd [#allocation7], %s51
      %s54 = sshll.u32 [#allocation8], 4
      %s55 = int_to_ptr.vmem [resolvable:$true] %s54
      %57 = dma.hbm_to_vmem [thread:$0]  %s3, 64, %s55, [#allocation7]
    $region17: #{tpu_custom_call.1} parent=1 // pred_fallthru
      _
    // Predicated region
    $region18: #{tpu_custom_call.1} parent=1 // pred_check
      _
    $region19: #{tpu_custom_call.1} parent=1 // pred_check_branch
      %59 = sbr.rel (0) target = $region21
    $region20: #{tpu_custom_call.1} parent=1 // pred_region
      %s61 = ssub.s32 65536, 65536
      %62 = vsyncadd [#allocation10], %s61
      %s63 = sshll.u32 [#allocation9], 4
      %s64 = int_to_ptr.vmem [resolvable:$true] %s63
      %69 = dma.hbm_to_vmem [thread:$0]  %s4, 65536, %s64, [#allocation10], 1024, 1024, 64
    $region21: #{tpu_custom_call.1} parent=1 // pred_fallthru
      _
    // Predicated region
    $region22: #{tpu_custom_call.1} parent=1 // pred_check
      _
    $region23: #{tpu_custom_call.1} parent=1 // pred_check_branch
      %71 = sbr.rel (0) target = $region25
    $region24: #{tpu_custom_call.1} parent=1 // pred_region
      %s73 = ssub.s32 128, 128
      %74 = vsyncadd [#allocation10], %s73
      %s76 = sshll.u32 [#allocation11], 4
      %s77 = int_to_ptr.vmem [resolvable:$true] %s76
      %79 = dma.hbm_to_vmem [thread:$0]  %s5, 128, %s77, [#allocation10]
    $region25: #{tpu_custom_call.1} parent=1 // pred_fallthru
      _
    // Predicated region
    $region26: #{tpu_custom_call.1} parent=1 // pred_check
      _
    $region27: #{tpu_custom_call.1} parent=1 // pred_check_branch
      %81 = sbr.rel (0) target = $region29
    $region28: #{tpu_custom_call.1} parent=1 // pred_region
      %82 = dma.done [#allocation4], 2048
    $region29: #{tpu_custom_call.1} parent=1 // pred_fallthru
      _
    // Predicated region
    $region30: #{tpu_custom_call.1} parent=1 // pred_check
      _
    $region31: #{tpu_custom_call.1} parent=1 // pred_check_branch
      %84 = sbr.rel (0) target = $region33
    $region32: #{tpu_custom_call.1} parent=1 // pred_region
      %85 = dma.done [#allocation7], 2048
    $region33: #{tpu_custom_call.1} parent=1 // pred_fallthru
      _
    // Predicated region
    $region34: #{tpu_custom_call.1} parent=1 // pred_check
      _
    $region35: #{tpu_custom_call.1} parent=1 // pred_check_branch
      %87 = sbr.rel (0) target = $region37
    $region36: #{tpu_custom_call.1} parent=1 // pred_region
      %88 = dma.done [#allocation7], 64
    $region37: #{tpu_custom_call.1} parent=1 // pred_fallthru
      _
    // Predicated region
    $region38: #{tpu_custom_call.1} parent=1 // pred_check
      _
    $region39: #{tpu_custom_call.1} parent=1 // pred_check_branch
      %90 = sbr.rel (0) target = $region41
    $region40: #{tpu_custom_call.1} parent=1 // pred_region
      %91 = dma.done [#allocation10], 65536
    $region41: #{tpu_custom_call.1} parent=1 // pred_fallthru
      _
    // Predicated region
    $region42: #{tpu_custom_call.1} parent=1 // pred_check
      _
    $region43: #{tpu_custom_call.1} parent=1 // pred_check_branch
      %93 = sbr.rel (0) target = $region45
    $region44: #{tpu_custom_call.1} parent=1 // pred_region
      %94 = dma.done [#allocation10], 128
    $region45: #{tpu_custom_call.1} parent=1 // pred_fallthru
      _
    %s95 = sld [smem:[#allocation2]]
    %v96 = vld [vmem:[#allocation3] sm:$0xff]
    %v97 = vld [vmem:[#allocation3 + $0x8] sm:$0xff]
    %v98 = vld [vmem:[#allocation3 + $0x10] sm:$0xff]
    %v99 = vld [vmem:[#allocation3 + $0x18] sm:$0xff]
    %v100 = vld [vmem:[#allocation3 + $0x20] sm:$0xff]
    %v101 = vld [vmem:[#allocation3 + $0x28] sm:$0xff]
    %v102 = vld [vmem:[#allocation3 + $0x30] sm:$0xff]
    %v103 = vld [vmem:[#allocation3 + $0x38] sm:$0xff]
    %v104 = vld [vmem:[#allocation3 + $0x40] sm:$0xff]
    %v105 = vld [vmem:[#allocation3 + $0x48] sm:$0xff]
    %v106 = vld [vmem:[#allocation3 + $0x50] sm:$0xff]
    %v107 = vld [vmem:[#allocation3 + $0x58] sm:$0xff]
    %v108 = vld [vmem:[#allocation3 + $0x60] sm:$0xff]
    %v109 = vld [vmem:[#allocation3 + $0x68] sm:$0xff]
    %v110 = vld [vmem:[#allocation3 + $0x70] sm:$0xff]
    %v111 = vld [vmem:[#allocation3 + $0x78] sm:$0xff]
    %v112 = vmax.f32 %v96, 1e-06
    %v113 = vmax.f32 %v97, 1e-06
    %v114 = vmax.f32 %v98, 1e-06
    %v115 = vmax.f32 %v99, 1e-06
    %v116 = vmax.f32 %v100, 1e-06
    %v117 = vmax.f32 %v101, 1e-06
    %v118 = vmax.f32 %v102, 1e-06
    %v119 = vmax.f32 %v103, 1e-06
    %v120 = vmax.f32 %v104, 1e-06
    %v121 = vmax.f32 %v105, 1e-06
    %v122 = vmax.f32 %v106, 1e-06
    %v123 = vmax.f32 %v107, 1e-06
    %v124 = vmax.f32 %v108, 1e-06
    %v125 = vmax.f32 %v109, 1e-06
    %v126 = vmax.f32 %v110, 1e-06
    %v127 = vmax.f32 %v111, 1e-06
    %v128 = vlog2.pop %v112
    %v129 = vmul.f32 %v128, 0.6931472
    %v130 = vlog2.pop %v113
    %v131 = vmul.f32 %v130, 0.6931472
    %v132 = vlog2.pop %v114
    %v133 = vmul.f32 %v132, 0.6931472
    %v134 = vlog2.pop %v115
    %v135 = vmul.f32 %v134, 0.6931472
    %v136 = vlog2.pop %v116
    %v137 = vmul.f32 %v136, 0.6931472
    %v138 = vlog2.pop %v117
    %v139 = vmul.f32 %v138, 0.6931472
    %v140 = vlog2.pop %v118
    %v141 = vmul.f32 %v140, 0.6931472
    %v142 = vlog2.pop %v119
    %v143 = vmul.f32 %v142, 0.6931472
    %v144 = vlog2.pop %v120
    %v145 = vmul.f32 %v144, 0.6931472
    %v146 = vlog2.pop %v121
    %v147 = vmul.f32 %v146, 0.6931472
    %v148 = vlog2.pop %v122
    %v149 = vmul.f32 %v148, 0.6931472
    %v150 = vlog2.pop %v123
    %v151 = vmul.f32 %v150, 0.6931472
    %v152 = vlog2.pop %v124
    %v153 = vmul.f32 %v152, 0.6931472
    %v154 = vlog2.pop %v125
    %v155 = vmul.f32 %v154, 0.6931472
    %v156 = vlog2.pop %v126
    %v157 = vmul.f32 %v156, 0.6931472
    %v158 = vlog2.pop %v127
    %v159 = vmul.f32 %v158, 0.6931472
    %v160 = vstv %s95
    %v161 = vmul.f32 %v160, %v129
    %v162 = vmul.f32 %v160, %v131
    %v163 = vmul.f32 %v160, %v133
    %v164 = vmul.f32 %v160, %v135
    %v165 = vmul.f32 %v160, %v137
    %v166 = vmul.f32 %v160, %v139
    %v167 = vmul.f32 %v160, %v141
    %v168 = vmul.f32 %v160, %v143
    %v169 = vmul.f32 %v160, %v145
    %v170 = vmul.f32 %v160, %v147
    %v171 = vmul.f32 %v160, %v149
    %v172 = vmul.f32 %v160, %v151
    %v173 = vmul.f32 %v160, %v153
    %v174 = vmul.f32 %v160, %v155
    %v175 = vmul.f32 %v160, %v157
    %v176 = vmul.f32 %v160, %v159
    %v177 = vmul.f32 %v161, 1.442695
    %v178 = vpow.pop %v177
    %v179 = vmul.f32 %v162, 1.442695
    %v180 = vpow.pop %v179
    %v181 = vmul.f32 %v163, 1.442695
    %v182 = vpow.pop %v181
    %v183 = vmul.f32 %v164, 1.442695
    %v184 = vpow.pop %v183
    %v185 = vmul.f32 %v165, 1.442695
    %v186 = vpow.pop %v185
    %v187 = vmul.f32 %v166, 1.442695
    %v188 = vpow.pop %v187
    %v189 = vmul.f32 %v167, 1.442695
    %v190 = vpow.pop %v189
    %v191 = vmul.f32 %v168, 1.442695
    %v192 = vpow.pop %v191
    %v193 = vmul.f32 %v169, 1.442695
    %v194 = vpow.pop %v193
    %v195 = vmul.f32 %v170, 1.442695
    %v196 = vpow.pop %v195
    %v197 = vmul.f32 %v171, 1.442695
    %v198 = vpow.pop %v197
    %v199 = vmul.f32 %v172, 1.442695
    %v200 = vpow.pop %v199
    %v201 = vmul.f32 %v173, 1.442695
    %v202 = vpow.pop %v201
    %v203 = vmul.f32 %v174, 1.442695
    %v204 = vpow.pop %v203
    %v205 = vmul.f32 %v175, 1.442695
    %v206 = vpow.pop %v205
    %v207 = vmul.f32 %v176, 1.442695
    %v208 = vpow.pop %v207
    %vm209 = vcmask 261120
    %v210 = vsel %vm209, %v178, 0.0
    %v211 = vsel %vm209, %v182, 0.0
    %v212 = vadd.f32 %v210, %v211
    %v213 = vsel %vm209, %v186, 0.0
    %v214 = vadd.f32 %v212, %v213
    %v215 = vsel %vm209, %v190, 0.0
    %v216 = vadd.f32 %v214, %v215
    %v217 = vsel %vm209, %v194, 0.0
    %v218 = vadd.f32 %v216, %v217
    %v219 = vsel %vm209, %v198, 0.0
    %v220 = vadd.f32 %v218, %v219
    %v221 = vsel %vm209, %v202, 0.0
    %v222 = vadd.f32 %v220, %v221
    %v223 = vsel %vm209, %v206, 0.0
    %v224 = vadd.f32 %v222, %v223
    %v225 = vsel %vm209, %v180, 0.0
    %v226 = vsel %vm209, %v184, 0.0
    %v227 = vadd.f32 %v225, %v226
    %v228 = vsel %vm209, %v188, 0.0
    %v229 = vadd.f32 %v227, %v228
    %v230 = vsel %vm209, %v192, 0.0
    %v231 = vadd.f32 %v229, %v230
    %v232 = vsel %vm209, %v196, 0.0
    %v233 = vadd.f32 %v231, %v232
    %v234 = vsel %vm209, %v200, 0.0
    %v235 = vadd.f32 %v233, %v234
    %v236 = vsel %vm209, %v204, 0.0
    %v237 = vadd.f32 %v235, %v236
    %v238 = vsel %vm209, %v208, 0.0
    %v239 = vadd.f32 %v237, %v238
    %v240 = vrcp.pop 8.0
    %v241 = vmul.f32 %v224, %v240
    %v242 = vmul.f32 %v239, %v240
    %v243 = vlog2.pop %v241
    %v244 = vmul.f32 %v243, 0.6931472
    %v245 = vlog2.pop %v242
    %v246 = vmul.f32 %v245, 0.6931472
    %v247 = vrcp.pop %v160
    %v248 = vmul.f32 %v244, %v247
    %v249 = vmul.f32 %v246, %v247
    %v250 = vmul.f32 %v248, 1.442695
    %v251 = vpow.pop %v250
    %v252 = vmul.f32 %v249, 1.442695
    %v253 = vpow.pop %v252
    %v254 = vld [vmem:[#allocation6] sm:$0xff]
    %v255 = vld [vmem:[#allocation6 + $0x8] sm:$0xff]
    %v256 = vld [vmem:[#allocation6 + $0x10] sm:$0xff]
    %v257 = vld [vmem:[#allocation6 + $0x18] sm:$0xff]
    %v258 = vld [vmem:[#allocation6 + $0x20] sm:$0xff]
    %v259 = vld [vmem:[#allocation6 + $0x28] sm:$0xff]
    %v260 = vld [vmem:[#allocation6 + $0x30] sm:$0xff]
    %v261 = vld [vmem:[#allocation6 + $0x38] sm:$0xff]
    %v262 = vld [vmem:[#allocation6 + $0x40] sm:$0xff]
    %v263 = vld [vmem:[#allocation6 + $0x48] sm:$0xff]
    %v264 = vld [vmem:[#allocation6 + $0x50] sm:$0xff]
    %v265 = vld [vmem:[#allocation6 + $0x58] sm:$0xff]
    %v266 = vld [vmem:[#allocation6 + $0x60] sm:$0xff]
    %v267 = vld [vmem:[#allocation6 + $0x68] sm:$0xff]
    %v268 = vld [vmem:[#allocation6 + $0x70] sm:$0xff]
    %v269 = vld [vmem:[#allocation6 + $0x78] sm:$0xff]
    %v270 = vld [vmem:[#allocation8] sm:$0xf]
    %v272 = vlaneseq
    %v273 = vshrl.u32 %v272, 7
    %v274 = vsub.s32 0, %v273
    %v275 = vrot.slane %v270, %v274
    %v276 = vlaneseq
    %v277 = vshrl.u32 %v276, 7
    %v278 = vsub.s32 1, %v277
    %v279 = vrot.slane %v270, %v278
    %v280 = vlaneseq
    %v281 = vshrl.u32 %v280, 7
    %v282 = vsub.s32 2, %v281
    %v283 = vrot.slane %v270, %v282
    %v284 = vlaneseq
    %v285 = vshrl.u32 %v284, 7
    %v286 = vsub.s32 3, %v285
    %v287 = vrot.slane %v270, %v286
    %v293 = vsel %vm209, %v251, 0
    %v296 = vsel %vm209, %v253, 0
    %298 = vmatprep.subr.mxu0 %v255
    %299 = vmatpush1.msra.mxu0 %v254
    %300 = vmatprep.subr.mxu0 %v259
    %301 = vmatpush1.msra.mxu0 %v258
    %302 = vmatprep.subr.mxu0 %v263
    %303 = vmatpush1.msra.mxu0 %v262
    %304 = vmatprep.subr.mxu0 %v267
    %305 = vmatpush1.msra.mxu0 %v266
    %306 = vmatprep.subr.mxu0 0.0
    %307 = vmatpush1.msra.mxu0 0.0
    %308 = vmatprep.subr.mxu0 0.0
    %309 = vmatpush1.msra.mxu0 0.0
    %310 = vmatprep.subr.mxu0 0.0
    %311 = vmatpush1.msra.mxu0 0.0
    %312 = vmatprep.subr.mxu0 0.0
    %313 = vmatpush1.msra.mxu0 0.0
    %314 = vmatprep.subr.mxu0 0.0
    %315 = vmatpush1.msra.mxu0 0.0
    %316 = vmatprep.subr.mxu0 0.0
    %317 = vmatpush1.msra.mxu0 0.0
    %318 = vmatprep.subr.mxu0 0.0
    %319 = vmatpush1.msra.mxu0 0.0
    %320 = vmatprep.subr.mxu0 0.0
    %321 = vmatpush1.msra.mxu0 0.0
    %322 = vmatprep.subr.mxu0 0.0
    %323 = vmatpush1.msra.mxu0 0.0
    %324 = vmatprep.subr.mxu0 0.0
    %325 = vmatpush1.msra.mxu0 0.0
    %326 = vmatprep.subr.mxu0 0.0
    %327 = vmatpush1.msra.mxu0 0.0
    %328 = vmatprep.subr.mxu0 0.0
    %329 = vmatpush1.msra.mxu0 0.0
    %330 = vmatprep.subr.mxu0 0.0
    %331 = vmatpush1.msra.mxu0 0.0
    %332 = vmatprep.subr.mxu0 0.0
    %333 = vmatpush1.msra.mxu0 0.0
    %334 = vmatprep.subr.mxu0 0.0
    %335 = vmatpush1.msra.mxu0 0.0
    %336 = vmatprep.subr.mxu0 0.0
    %337 = vmatpush1.msra.mxu0 0.0
    %338 = vmatprep.subr.mxu0 0.0
    %339 = vmatpush1.msra.mxu0 0.0
    %340 = vmatprep.subr.mxu0 0.0
    %341 = vmatpush1.msra.mxu0 0.0
    %342 = vmatprep.subr.mxu0 0.0
    %343 = vmatpush1.msra.mxu0 0.0
    %344 = vmatprep.subr.mxu0 0.0
    %345 = vmatpush1.msra.mxu0 0.0
    %346 = vmatprep.subr.mxu0 0.0
    %347 = vmatpush1.msra.mxu0 0.0
    %348 = vmatprep.subr.mxu0 0.0
    %349 = vmatpush1.msra.mxu0 0.0
    %350 = vmatprep.subr.mxu0 0.0
    %351 = vmatpush1.msra.mxu0 0.0
    %352 = vmatprep.subr.mxu0 0.0
    %353 = vmatpush1.msra.mxu0 0.0
    %354 = vmatprep.subr.mxu0 0.0
    %355 = vmatpush1.msra.mxu0 0.0
    %356 = vmatprep.subr.mxu0 0.0
    %357 = vmatpush1.msra.mxu0 0.0
    %358 = vmatprep.subr.mxu0 0.0
    %359 = vmatpush1.msra.mxu0 0.0
    %360 = vmatprep.subr.mxu0 0.0
    %361 = vmatpush1.msra.mxu0 0.0
    %362 = vmatprep.mubr.f32.mxu0 0.0
    %363 = vmatmul.mubr.f32.gmra.mrb[0].mxu0 %v293
    %v364 = vpop.f32.mrb[0].mxu0
    %v365 = vadd.f32 %v275, %v364
    %v366 = vpop.f32.mrb[0].mxu0
    %v367 = vadd.f32 %v279, %v366
    %368 = vmatprep.mubr.f32.mxu0 0.0
    %369 = vmatmul.mubr.f32.gmra.mrb[0].mxu0 %v296
    %v370 = vpop.f32.mrb[0].mxu0
    %v371 = vadd.f32 %v275, %v370
    %v372 = vpop.f32.mrb[0].mxu0
    %v373 = vadd.f32 %v279, %v372
    %374 = vdwg.mxu0
    %375 = vmatprep.subr.mxu0 %v257
    %376 = vmatpush1.msra.mxu0 %v256
    %377 = vmatprep.subr.mxu0 %v261
    %378 = vmatpush1.msra.mxu0 %v260
    %379 = vmatprep.subr.mxu0 %v265
    %380 = vmatpush1.msra.mxu0 %v264
    %381 = vmatprep.subr.mxu0 %v269
    %382 = vmatpush1.msra.mxu0 %v268
    %383 = vmatprep.subr.mxu0 0.0
    %384 = vmatpush1.msra.mxu0 0.0
    %385 = vmatprep.subr.mxu0 0.0
    %386 = vmatpush1.msra.mxu0 0.0
    %387 = vmatprep.subr.mxu0 0.0
    %388 = vmatpush1.msra.mxu0 0.0
    %389 = vmatprep.subr.mxu0 0.0
    %390 = vmatpush1.msra.mxu0 0.0
    %391 = vmatprep.subr.mxu0 0.0
    %392 = vmatpush1.msra.mxu0 0.0
    %393 = vmatprep.subr.mxu0 0.0
    %394 = vmatpush1.msra.mxu0 0.0
    %395 = vmatprep.subr.mxu0 0.0
    %396 = vmatpush1.msra.mxu0 0.0
    %397 = vmatprep.subr.mxu0 0.0
    %398 = vmatpush1.msra.mxu0 0.0
    %399 = vmatprep.subr.mxu0 0.0
    %400 = vmatpush1.msra.mxu0 0.0
    %401 = vmatprep.subr.mxu0 0.0
    %402 = vmatpush1.msra.mxu0 0.0
    %403 = vmatprep.subr.mxu0 0.0
    %404 = vmatpush1.msra.mxu0 0.0
    %405 = vmatprep.subr.mxu0 0.0
    %406 = vmatpush1.msra.mxu0 0.0
    %407 = vmatprep.subr.mxu0 0.0
    %408 = vmatpush1.msra.mxu0 0.0
    %409 = vmatprep.subr.mxu0 0.0
    %410 = vmatpush1.msra.mxu0 0.0
    %411 = vmatprep.subr.mxu0 0.0
    %412 = vmatpush1.msra.mxu0 0.0
    %413 = vmatprep.subr.mxu0 0.0
    %414 = vmatpush1.msra.mxu0 0.0
    %415 = vmatprep.subr.mxu0 0.0
    %416 = vmatpush1.msra.mxu0 0.0
    %417 = vmatprep.subr.mxu0 0.0
    %418 = vmatpush1.msra.mxu0 0.0
    %419 = vmatprep.subr.mxu0 0.0
    %420 = vmatpush1.msra.mxu0 0.0
    %421 = vmatprep.subr.mxu0 0.0
    %422 = vmatpush1.msra.mxu0 0.0
    %423 = vmatprep.subr.mxu0 0.0
    %424 = vmatpush1.msra.mxu0 0.0
    %425 = vmatprep.subr.mxu0 0.0
    %426 = vmatpush1.msra.mxu0 0.0
    %427 = vmatprep.subr.mxu0 0.0
    %428 = vmatpush1.msra.mxu0 0.0
    %429 = vmatprep.subr.mxu0 0.0
    %430 = vmatpush1.msra.mxu0 0.0
    %431 = vmatprep.subr.mxu0 0.0
    %432 = vmatpush1.msra.mxu0 0.0
    %433 = vmatprep.subr.mxu0 0.0
    %434 = vmatpush1.msra.mxu0 0.0
    %435 = vmatprep.subr.mxu0 0.0
    %436 = vmatpush1.msra.mxu0 0.0
    %437 = vmatprep.subr.mxu0 0.0
    %438 = vmatpush1.msra.mxu0 0.0
    %439 = vmatprep.mubr.f32.mxu0 0.0
    %440 = vmatmul.mubr.f32.gmra.mrb[0].mxu0 %v293
    %v441 = vpop.f32.mrb[0].mxu0
    %v442 = vadd.f32 %v283, %v441
    %v443 = vpop.f32.mrb[0].mxu0
    %v444 = vadd.f32 %v287, %v443
    %445 = vmatprep.mubr.f32.mxu0 0.0
    %446 = vmatmul.mubr.f32.gmra.mrb[0].mxu0 %v296
    %v447 = vpop.f32.mrb[0].mxu0
    %v448 = vadd.f32 %v283, %v447
    %v449 = vpop.f32.mrb[0].mxu0
    %v450 = vadd.f32 %v287, %v449
    %451 = vdwg.mxu0
    %v452 = vmax.f32 %v365, 0.0
    %v453 = vmax.f32 %v367, 0.0
    %v454 = vmax.f32 %v442, 0.0
    %v455 = vmax.f32 %v444, 0.0
    %v456 = vmax.f32 %v371, 0.0
    %v457 = vmax.f32 %v373, 0.0
    %v458 = vmax.f32 %v448, 0.0
    %v459 = vmax.f32 %v450, 0.0
    %v460 = vld [vmem:[#allocation9] sm:$0xff]
    %v461 = vld [vmem:[#allocation9 + $0x8] sm:$0xff]
    %v462 = vld [vmem:[#allocation9 + $0x10] sm:$0xff]
    %v463 = vld [vmem:[#allocation9 + $0x18] sm:$0xff]
    %v464 = vld [vmem:[#allocation9 + $0x20] sm:$0xff]
    %v465 = vld [vmem:[#allocation9 + $0x28] sm:$0xff]
    %v466 = vld [vmem:[#allocation9 + $0x30] sm:$0xff]
    %v467 = vld [vmem:[#allocation9 + $0x38] sm:$0xff]
    %v468 = vld [vmem:[#allocation9 + $0x40] sm:$0xff]
    %v469 = vld [vmem:[#allocation9 + $0x48] sm:$0xff]
    %v470 = vld [vmem:[#allocation9 + $0x50] sm:$0xff]
    %v471 = vld [vmem:[#allocation9 + $0x58] sm:$0xff]
    %v472 = vld [vmem:[#allocation9 + $0x60] sm:$0xff]
    %v473 = vld [vmem:[#allocation9 + $0x68] sm:$0xff]
    %v474 = vld [vmem:[#allocation9 + $0x70] sm:$0xff]
    %v475 = vld [vmem:[#allocation9 + $0x78] sm:$0xff]
    %v476 = vld [vmem:[#allocation9 + $0x80] sm:$0xff]
    %v477 = vld [vmem:[#allocation9 + $0x88] sm:$0xff]
    %v478 = vld [vmem:[#allocation9 + $0x90] sm:$0xff]
    %v479 = vld [vmem:[#allocation9 + $0x98] sm:$0xff]
    %v480 = vld [vmem:[#allocation9 + $0xa0] sm:$0xff]
    %v481 = vld [vmem:[#allocation9 + $0xa8] sm:$0xff]
    %v482 = vld [vmem:[#allocation9 + $0xb0] sm:$0xff]
    %v483 = vld [vmem:[#allocation9 + $0xb8] sm:$0xff]
    %v484 = vld [vmem:[#allocation9 + $0xc0] sm:$0xff]
    %v485 = vld [vmem:[#allocation9 + $0xc8] sm:$0xff]
    %v486 = vld [vmem:[#allocation9 + $0xd0] sm:$0xff]
    %v487 = vld [vmem:[#allocation9 + $0xd8] sm:$0xff]
    %v488 = vld [vmem:[#allocation9 + $0xe0] sm:$0xff]
    %v489 = vld [vmem:[#allocation9 + $0xe8] sm:$0xff]
    %v490 = vld [vmem:[#allocation9 + $0xf0] sm:$0xff]
    %v491 = vld [vmem:[#allocation9 + $0xf8] sm:$0xff]
    %v492 = vld [vmem:[#allocation9 + $0x100] sm:$0xff]
    %v493 = vld [vmem:[#allocation9 + $0x108] sm:$0xff]
    %v494 = vld [vmem:[#allocation9 + $0x110] sm:$0xff]
    %v495 = vld [vmem:[#allocation9 + $0x118] sm:$0xff]
    %v496 = vld [vmem:[#allocation9 + $0x120] sm:$0xff]
    %v497 = vld [vmem:[#allocation9 + $0x128] sm:$0xff]
    %v498 = vld [vmem:[#allocation9 + $0x130] sm:$0xff]
    %v499 = vld [vmem:[#allocation9 + $0x138] sm:$0xff]
    %v500 = vld [vmem:[#allocation9 + $0x140] sm:$0xff]
    %v501 = vld [vmem:[#allocation9 + $0x148] sm:$0xff]
    %v502 = vld [vmem:[#allocation9 + $0x150] sm:$0xff]
    %v503 = vld [vmem:[#allocation9 + $0x158] sm:$0xff]
    %v504 = vld [vmem:[#allocation9 + $0x160] sm:$0xff]
    %v505 = vld [vmem:[#allocation9 + $0x168] sm:$0xff]
    %v506 = vld [vmem:[#allocation9 + $0x170] sm:$0xff]
    %v507 = vld [vmem:[#allocation9 + $0x178] sm:$0xff]
    %v508 = vld [vmem:[#allocation9 + $0x180] sm:$0xff]
    %v509 = vld [vmem:[#allocation9 + $0x188] sm:$0xff]
    %v510 = vld [vmem:[#allocation9 + $0x190] sm:$0xff]
    %v511 = vld [vmem:[#allocation9 + $0x198] sm:$0xff]
    %v512 = vld [vmem:[#allocation9 + $0x1a0] sm:$0xff]
    %v513 = vld [vmem:[#allocation9 + $0x1a8] sm:$0xff]
    %v514 = vld [vmem:[#allocation9 + $0x1b0] sm:$0xff]
    %v515 = vld [vmem:[#allocation9 + $0x1b8] sm:$0xff]
    %v516 = vld [vmem:[#allocation9 + $0x1c0] sm:$0xff]
    %v517 = vld [vmem:[#allocation9 + $0x1c8] sm:$0xff]
    %v518 = vld [vmem:[#allocation9 + $0x1d0] sm:$0xff]
    %v519 = vld [vmem:[#allocation9 + $0x1d8] sm:$0xff]
    %v520 = vld [vmem:[#allocation9 + $0x1e0] sm:$0xff]
    %v521 = vld [vmem:[#allocation9 + $0x1e8] sm:$0xff]
    %v522 = vld [vmem:[#allocation9 + $0x1f0] sm:$0xff]
    %v523 = vld [vmem:[#allocation9 + $0x1f8] sm:$0xff]
    %v524 = vld [vmem:[#allocation9 + $0x200] sm:$0xff]
    %v525 = vld [vmem:[#allocation9 + $0x208] sm:$0xff]
    %v526 = vld [vmem:[#allocation9 + $0x210] sm:$0xff]
    %v527 = vld [vmem:[#allocation9 + $0x218] sm:$0xff]
    %v528 = vld [vmem:[#allocation9 + $0x220] sm:$0xff]
    %v529 = vld [vmem:[#allocation9 + $0x228] sm:$0xff]
    %v530 = vld [vmem:[#allocation9 + $0x230] sm:$0xff]
    %v531 = vld [vmem:[#allocation9 + $0x238] sm:$0xff]
    %v532 = vld [vmem:[#allocation9 + $0x240] sm:$0xff]
    %v533 = vld [vmem:[#allocation9 + $0x248] sm:$0xff]
    %v534 = vld [vmem:[#allocation9 + $0x250] sm:$0xff]
    %v535 = vld [vmem:[#allocation9 + $0x258] sm:$0xff]
    %v536 = vld [vmem:[#allocation9 + $0x260] sm:$0xff]
    %v537 = vld [vmem:[#allocation9 + $0x268] sm:$0xff]
    %v538 = vld [vmem:[#allocation9 + $0x270] sm:$0xff]
    %v539 = vld [vmem:[#allocation9 + $0x278] sm:$0xff]
    %v540 = vld [vmem:[#allocation9 + $0x280] sm:$0xff]
    %v541 = vld [vmem:[#allocation9 + $0x288] sm:$0xff]
    %v542 = vld [vmem:[#allocation9 + $0x290] sm:$0xff]
    %v543 = vld [vmem:[#allocation9 + $0x298] sm:$0xff]
    %v544 = vld [vmem:[#allocation9 + $0x2a0] sm:$0xff]
    %v545 = vld [vmem:[#allocation9 + $0x2a8] sm:$0xff]
    %v546 = vld [vmem:[#allocation9 + $0x2b0] sm:$0xff]
    %v547 = vld [vmem:[#allocation9 + $0x2b8] sm:$0xff]
    %v548 = vld [vmem:[#allocation9 + $0x2c0] sm:$0xff]
    %v549 = vld [vmem:[#allocation9 + $0x2c8] sm:$0xff]
    %v550 = vld [vmem:[#allocation9 + $0x2d0] sm:$0xff]
    %v551 = vld [vmem:[#allocation9 + $0x2d8] sm:$0xff]
    %v552 = vld [vmem:[#allocation9 + $0x2e0] sm:$0xff]
    %v553 = vld [vmem:[#allocation9 + $0x2e8] sm:$0xff]
    %v554 = vld [vmem:[#allocation9 + $0x2f0] sm:$0xff]
    %v555 = vld [vmem:[#allocation9 + $0x2f8] sm:$0xff]
    %v556 = vld [vmem:[#allocation9 + $0x300] sm:$0xff]
    %v557 = vld [vmem:[#allocation9 + $0x308] sm:$0xff]
    %v558 = vld [vmem:[#allocation9 + $0x310] sm:$0xff]
    %v559 = vld [vmem:[#allocation9 + $0x318] sm:$0xff]
    %v560 = vld [vmem:[#allocation9 + $0x320] sm:$0xff]
    %v561 = vld [vmem:[#allocation9 + $0x328] sm:$0xff]
    %v562 = vld [vmem:[#allocation9 + $0x330] sm:$0xff]
    %v563 = vld [vmem:[#allocation9 + $0x338] sm:$0xff]
    %v564 = vld [vmem:[#allocation9 + $0x340] sm:$0xff]
    %v565 = vld [vmem:[#allocation9 + $0x348] sm:$0xff]
    %v566 = vld [vmem:[#allocation9 + $0x350] sm:$0xff]
    %v567 = vld [vmem:[#allocation9 + $0x358] sm:$0xff]
    %v568 = vld [vmem:[#allocation9 + $0x360] sm:$0xff]
    %v569 = vld [vmem:[#allocation9 + $0x368] sm:$0xff]
    %v570 = vld [vmem:[#allocation9 + $0x370] sm:$0xff]
    %v571 = vld [vmem:[#allocation9 + $0x378] sm:$0xff]
    %v572 = vld [vmem:[#allocation9 + $0x380] sm:$0xff]
    %v573 = vld [vmem:[#allocation9 + $0x388] sm:$0xff]
    %v574 = vld [vmem:[#allocation9 + $0x390] sm:$0xff]
    %v575 = vld [vmem:[#allocation9 + $0x398] sm:$0xff]
    %v576 = vld [vmem:[#allocation9 + $0x3a0] sm:$0xff]
    %v577 = vld [vmem:[#allocation9 + $0x3a8] sm:$0xff]
    %v578 = vld [vmem:[#allocation9 + $0x3b0] sm:$0xff]
    %v579 = vld [vmem:[#allocation9 + $0x3b8] sm:$0xff]
    %v580 = vld [vmem:[#allocation9 + $0x3c0] sm:$0xff]
    %v581 = vld [vmem:[#allocation9 + $0x3c8] sm:$0xff]
    %v582 = vld [vmem:[#allocation9 + $0x3d0] sm:$0xff]
    %v583 = vld [vmem:[#allocation9 + $0x3d8] sm:$0xff]
    %v584 = vld [vmem:[#allocation9 + $0x3e0] sm:$0xff]
    %v585 = vld [vmem:[#allocation9 + $0x3e8] sm:$0xff]
    %v586 = vld [vmem:[#allocation9 + $0x3f0] sm:$0xff]
    %v587 = vld [vmem:[#allocation9 + $0x3f8] sm:$0xff]
    %v588 = vld [vmem:[#allocation9 + $0x400] sm:$0xff]
    %v589 = vld [vmem:[#allocation9 + $0x408] sm:$0xff]
    %v590 = vld [vmem:[#allocation9 + $0x410] sm:$0xff]
    %v591 = vld [vmem:[#allocation9 + $0x418] sm:$0xff]
    %v592 = vld [vmem:[#allocation9 + $0x420] sm:$0xff]
    %v593 = vld [vmem:[#allocation9 + $0x428] sm:$0xff]
    %v594 = vld [vmem:[#allocation9 + $0x430] sm:$0xff]
    %v595 = vld [vmem:[#allocation9 + $0x438] sm:$0xff]
    %v596 = vld [vmem:[#allocation9 + $0x440] sm:$0xff]
    %v597 = vld [vmem:[#allocation9 + $0x448] sm:$0xff]
    %v598 = vld [vmem:[#allocation9 + $0x450] sm:$0xff]
    %v599 = vld [vmem:[#allocation9 + $0x458] sm:$0xff]
    %v600 = vld [vmem:[#allocation9 + $0x460] sm:$0xff]
    %v601 = vld [vmem:[#allocation9 + $0x468] sm:$0xff]
    %v602 = vld [vmem:[#allocation9 + $0x470] sm:$0xff]
    %v603 = vld [vmem:[#allocation9 + $0x478] sm:$0xff]
    %v604 = vld [vmem:[#allocation9 + $0x480] sm:$0xff]
    %v605 = vld [vmem:[#allocation9 + $0x488] sm:$0xff]
    %v606 = vld [vmem:[#allocation9 + $0x490] sm:$0xff]
    %v607 = vld [vmem:[#allocation9 + $0x498] sm:$0xff]
    %v608 = vld [vmem:[#allocation9 + $0x4a0] sm:$0xff]
    %v609 = vld [vmem:[#allocation9 + $0x4a8] sm:$0xff]
    %v610 = vld [vmem:[#allocation9 + $0x4b0] sm:$0xff]
    %v611 = vld [vmem:[#allocation9 + $0x4b8] sm:$0xff]
    %v612 = vld [vmem:[#allocation9 + $0x4c0] sm:$0xff]
    %v613 = vld [vmem:[#allocation9 + $0x4c8] sm:$0xff]
    %v614 = vld [vmem:[#allocation9 + $0x4d0] sm:$0xff]
    %v615 = vld [vmem:[#allocation9 + $0x4d8] sm:$0xff]
    %v616 = vld [vmem:[#allocation9 + $0x4e0] sm:$0xff]
    %v617 = vld [vmem:[#allocation9 + $0x4e8] sm:$0xff]
    %v618 = vld [vmem:[#allocation9 + $0x4f0] sm:$0xff]
    %v619 = vld [vmem:[#allocation9 + $0x4f8] sm:$0xff]
    %v620 = vld [vmem:[#allocation9 + $0x500] sm:$0xff]
    %v621 = vld [vmem:[#allocation9 + $0x508] sm:$0xff]
    %v622 = vld [vmem:[#allocation9 + $0x510] sm:$0xff]
    %v623 = vld [vmem:[#allocation9 + $0x518] sm:$0xff]
    %v624 = vld [vmem:[#allocation9 + $0x520] sm:$0xff]
    %v625 = vld [vmem:[#allocation9 + $0x528] sm:$0xff]
    %v626 = vld [vmem:[#allocation9 + $0x530] sm:$0xff]
    %v627 = vld [vmem:[#allocation9 + $0x538] sm:$0xff]
    %v628 = vld [vmem:[#allocation9 + $0x540] sm:$0xff]
    %v629 = vld [vmem:[#allocation9 + $0x548] sm:$0xff]
    %v630 = vld [vmem:[#allocation9 + $0x550] sm:$0xff]
    %v631 = vld [vmem:[#allocation9 + $0x558] sm:$0xff]
    %v632 = vld [vmem:[#allocation9 + $0x560] sm:$0xff]
    %v633 = vld [vmem:[#allocation9 + $0x568] sm:$0xff]
    %v634 = vld [vmem:[#allocation9 + $0x570] sm:$0xff]
    %v635 = vld [vmem:[#allocation9 + $0x578] sm:$0xff]
    %v636 = vld [vmem:[#allocation9 + $0x580] sm:$0xff]
    %v637 = vld [vmem:[#allocation9 + $0x588] sm:$0xff]
    %v638 = vld [vmem:[#allocation9 + $0x590] sm:$0xff]
    %v639 = vld [vmem:[#allocation9 + $0x598] sm:$0xff]
    %v640 = vld [vmem:[#allocation9 + $0x5a0] sm:$0xff]
    %v641 = vld [vmem:[#allocation9 + $0x5a8] sm:$0xff]
    %v642 = vld [vmem:[#allocation9 + $0x5b0] sm:$0xff]
    %v643 = vld [vmem:[#allocation9 + $0x5b8] sm:$0xff]
    %v644 = vld [vmem:[#allocation9 + $0x5c0] sm:$0xff]
    %v645 = vld [vmem:[#allocation9 + $0x5c8] sm:$0xff]
    %v646 = vld [vmem:[#allocation9 + $0x5d0] sm:$0xff]
    %v647 = vld [vmem:[#allocation9 + $0x5d8] sm:$0xff]
    %v648 = vld [vmem:[#allocation9 + $0x5e0] sm:$0xff]
    %v649 = vld [vmem:[#allocation9 + $0x5e8] sm:$0xff]
    %v650 = vld [vmem:[#allocation9 + $0x5f0] sm:$0xff]
    %v651 = vld [vmem:[#allocation9 + $0x5f8] sm:$0xff]
    %v652 = vld [vmem:[#allocation9 + $0x600] sm:$0xff]
    %v653 = vld [vmem:[#allocation9 + $0x608] sm:$0xff]
    %v654 = vld [vmem:[#allocation9 + $0x610] sm:$0xff]
    %v655 = vld [vmem:[#allocation9 + $0x618] sm:$0xff]
    %v656 = vld [vmem:[#allocation9 + $0x620] sm:$0xff]
    %v657 = vld [vmem:[#allocation9 + $0x628] sm:$0xff]
    %v658 = vld [vmem:[#allocation9 + $0x630] sm:$0xff]
    %v659 = vld [vmem:[#allocation9 + $0x638] sm:$0xff]
    %v660 = vld [vmem:[#allocation9 + $0x640] sm:$0xff]
    %v661 = vld [vmem:[#allocation9 + $0x648] sm:$0xff]
    %v662 = vld [vmem:[#allocation9 + $0x650] sm:$0xff]
    %v663 = vld [vmem:[#allocation9 + $0x658] sm:$0xff]
    %v664 = vld [vmem:[#allocation9 + $0x660] sm:$0xff]
    %v665 = vld [vmem:[#allocation9 + $0x668] sm:$0xff]
    %v666 = vld [vmem:[#allocation9 + $0x670] sm:$0xff]
    %v667 = vld [vmem:[#allocation9 + $0x678] sm:$0xff]
    %v668 = vld [vmem:[#allocation9 + $0x680] sm:$0xff]
    %v669 = vld [vmem:[#allocation9 + $0x688] sm:$0xff]
    %v670 = vld [vmem:[#allocation9 + $0x690] sm:$0xff]
    %v671 = vld [vmem:[#allocation9 + $0x698] sm:$0xff]
    %v672 = vld [vmem:[#allocation9 + $0x6a0] sm:$0xff]
    %v673 = vld [vmem:[#allocation9 + $0x6a8] sm:$0xff]
    %v674 = vld [vmem:[#allocation9 + $0x6b0] sm:$0xff]
    %v675 = vld [vmem:[#allocation9 + $0x6b8] sm:$0xff]
    %v676 = vld [vmem:[#allocation9 + $0x6c0] sm:$0xff]
    %v677 = vld [vmem:[#allocation9 + $0x6c8] sm:$0xff]
    %v678 = vld [vmem:[#allocation9 + $0x6d0] sm:$0xff]
    %v679 = vld [vmem:[#allocation9 + $0x6d8] sm:$0xff]
    %v680 = vld [vmem:[#allocation9 + $0x6e0] sm:$0xff]
    %v681 = vld [vmem:[#allocation9 + $0x6e8] sm:$0xff]
    %v682 = vld [vmem:[#allocation9 + $0x6f0] sm:$0xff]
    %v683 = vld [vmem:[#allocation9 + $0x6f8] sm:$0xff]
    %v684 = vld [vmem:[#allocation9 + $0x700] sm:$0xff]
    %v685 = vld [vmem:[#allocation9 + $0x708] sm:$0xff]
    %v686 = vld [vmem:[#allocation9 + $0x710] sm:$0xff]
    %v687 = vld [vmem:[#allocation9 + $0x718] sm:$0xff]
    %v688 = vld [vmem:[#allocation9 + $0x720] sm:$0xff]
    %v689 = vld [vmem:[#allocation9 + $0x728] sm:$0xff]
    %v690 = vld [vmem:[#allocation9 + $0x730] sm:$0xff]
    %v691 = vld [vmem:[#allocation9 + $0x738] sm:$0xff]
    %v692 = vld [vmem:[#allocation9 + $0x740] sm:$0xff]
    %v693 = vld [vmem:[#allocation9 + $0x748] sm:$0xff]
    %v694 = vld [vmem:[#allocation9 + $0x750] sm:$0xff]
    %v695 = vld [vmem:[#allocation9 + $0x758] sm:$0xff]
    %v696 = vld [vmem:[#allocation9 + $0x760] sm:$0xff]
    %v697 = vld [vmem:[#allocation9 + $0x768] sm:$0xff]
    %v698 = vld [vmem:[#allocation9 + $0x770] sm:$0xff]
    %v699 = vld [vmem:[#allocation9 + $0x778] sm:$0xff]
    %v700 = vld [vmem:[#allocation9 + $0x780] sm:$0xff]
    %v701 = vld [vmem:[#allocation9 + $0x788] sm:$0xff]
    %v702 = vld [vmem:[#allocation9 + $0x790] sm:$0xff]
    %v703 = vld [vmem:[#allocation9 + $0x798] sm:$0xff]
    %v704 = vld [vmem:[#allocation9 + $0x7a0] sm:$0xff]
    %v705 = vld [vmem:[#allocation9 + $0x7a8] sm:$0xff]
    %v706 = vld [vmem:[#allocation9 + $0x7b0] sm:$0xff]
    %v707 = vld [vmem:[#allocation9 + $0x7b8] sm:$0xff]
    %v708 = vld [vmem:[#allocation9 + $0x7c0] sm:$0xff]
    %v709 = vld [vmem:[#allocation9 + $0x7c8] sm:$0xff]
    %v710 = vld [vmem:[#allocation9 + $0x7d0] sm:$0xff]
    %v711 = vld [vmem:[#allocation9 + $0x7d8] sm:$0xff]
    %v712 = vld [vmem:[#allocation9 + $0x7e0] sm:$0xff]
    %v713 = vld [vmem:[#allocation9 + $0x7e8] sm:$0xff]
    %v714 = vld [vmem:[#allocation9 + $0x7f0] sm:$0xff]
    %v715 = vld [vmem:[#allocation9 + $0x7f8] sm:$0xff]
    %v716 = vld [vmem:[#allocation9 + $0x800] sm:$0xff]
    %v717 = vld [vmem:[#allocation9 + $0x808] sm:$0xff]
    %v718 = vld [vmem:[#allocation9 + $0x810] sm:$0xff]
    %v719 = vld [vmem:[#allocation9 + $0x818] sm:$0xff]
    %v720 = vld [vmem:[#allocation9 + $0x820] sm:$0xff]
    %v721 = vld [vmem:[#allocation9 + $0x828] sm:$0xff]
    %v722 = vld [vmem:[#allocation9 + $0x830] sm:$0xff]
    %v723 = vld [vmem:[#allocation9 + $0x838] sm:$0xff]
    %v724 = vld [vmem:[#allocation9 + $0x840] sm:$0xff]
    %v725 = vld [vmem:[#allocation9 + $0x848] sm:$0xff]
    %v726 = vld [vmem:[#allocation9 + $0x850] sm:$0xff]
    %v727 = vld [vmem:[#allocation9 + $0x858] sm:$0xff]
    %v728 = vld [vmem:[#allocation9 + $0x860] sm:$0xff]
    %v729 = vld [vmem:[#allocation9 + $0x868] sm:$0xff]
    %v730 = vld [vmem:[#allocation9 + $0x870] sm:$0xff]
    %v731 = vld [vmem:[#allocation9 + $0x878] sm:$0xff]
    %v732 = vld [vmem:[#allocation9 + $0x880] sm:$0xff]
    %v733 = vld [vmem:[#allocation9 + $0x888] sm:$0xff]
    %v734 = vld [vmem:[#allocation9 + $0x890] sm:$0xff]
    %v735 = vld [vmem:[#allocation9 + $0x898] sm:$0xff]
    %v736 = vld [vmem:[#allocation9 + $0x8a0] sm:$0xff]
    %v737 = vld [vmem:[#allocation9 + $0x8a8] sm:$0xff]
    %v738 = vld [vmem:[#allocation9 + $0x8b0] sm:$0xff]
    %v739 = vld [vmem:[#allocation9 + $0x8b8] sm:$0xff]
    %v740 = vld [vmem:[#allocation9 + $0x8c0] sm:$0xff]
    %v741 = vld [vmem:[#allocation9 + $0x8c8] sm:$0xff]
    %v742 = vld [vmem:[#allocation9 + $0x8d0] sm:$0xff]
    %v743 = vld [vmem:[#allocation9 + $0x8d8] sm:$0xff]
    %v744 = vld [vmem:[#allocation9 + $0x8e0] sm:$0xff]
    %v745 = vld [vmem:[#allocation9 + $0x8e8] sm:$0xff]
    %v746 = vld [vmem:[#allocation9 + $0x8f0] sm:$0xff]
    %v747 = vld [vmem:[#allocation9 + $0x8f8] sm:$0xff]
    %v748 = vld [vmem:[#allocation9 + $0x900] sm:$0xff]
    %v749 = vld [vmem:[#allocation9 + $0x908] sm:$0xff]
    %v750 = vld [vmem:[#allocation9 + $0x910] sm:$0xff]
    %v751 = vld [vmem:[#allocation9 + $0x918] sm:$0xff]
    %v752 = vld [vmem:[#allocation9 + $0x920] sm:$0xff]
    %v753 = vld [vmem:[#allocation9 + $0x928] sm:$0xff]
    %v754 = vld [vmem:[#allocation9 + $0x930] sm:$0xff]
    %v755 = vld [vmem:[#allocation9 + $0x938] sm:$0xff]
    %v756 = vld [vmem:[#allocation9 + $0x940] sm:$0xff]
    %v757 = vld [vmem:[#allocation9 + $0x948] sm:$0xff]
    %v758 = vld [vmem:[#allocation9 + $0x950] sm:$0xff]
    %v759 = vld [vmem:[#allocation9 + $0x958] sm:$0xff]
    %v760 = vld [vmem:[#allocation9 + $0x960] sm:$0xff]
    %v761 = vld [vmem:[#allocation9 + $0x968] sm:$0xff]
    %v762 = vld [vmem:[#allocation9 + $0x970] sm:$0xff]
    %v763 = vld [vmem:[#allocation9 + $0x978] sm:$0xff]
    %v764 = vld [vmem:[#allocation9 + $0x980] sm:$0xff]
    %v765 = vld [vmem:[#allocation9 + $0x988] sm:$0xff]
    %v766 = vld [vmem:[#allocation9 + $0x990] sm:$0xff]
    %v767 = vld [vmem:[#allocation9 + $0x998] sm:$0xff]
    %v768 = vld [vmem:[#allocation9 + $0x9a0] sm:$0xff]
    %v769 = vld [vmem:[#allocation9 + $0x9a8] sm:$0xff]
    %v770 = vld [vmem:[#allocation9 + $0x9b0] sm:$0xff]
    %v771 = vld [vmem:[#allocation9 + $0x9b8] sm:$0xff]
    %v772 = vld [vmem:[#allocation9 + $0x9c0] sm:$0xff]
    %v773 = vld [vmem:[#allocation9 + $0x9c8] sm:$0xff]
    %v774 = vld [vmem:[#allocation9 + $0x9d0] sm:$0xff]
    %v775 = vld [vmem:[#allocation9 + $0x9d8] sm:$0xff]
    %v776 = vld [vmem:[#allocation9 + $0x9e0] sm:$0xff]
    %v777 = vld [vmem:[#allocation9 + $0x9e8] sm:$0xff]
    %v778 = vld [vmem:[#allocation9 + $0x9f0] sm:$0xff]
    %v779 = vld [vmem:[#allocation9 + $0x9f8] sm:$0xff]
    %v780 = vld [vmem:[#allocation9 + $0xa00] sm:$0xff]
    %v781 = vld [vmem:[#allocation9 + $0xa08] sm:$0xff]
    %v782 = vld [vmem:[#allocation9 + $0xa10] sm:$0xff]
    %v783 = vld [vmem:[#allocation9 + $0xa18] sm:$0xff]
    %v784 = vld [vmem:[#allocation9 + $0xa20] sm:$0xff]
    %v785 = vld [vmem:[#allocation9 + $0xa28] sm:$0xff]
    %v786 = vld [vmem:[#allocation9 + $0xa30] sm:$0xff]
    %v787 = vld [vmem:[#allocation9 + $0xa38] sm:$0xff]
    %v788 = vld [vmem:[#allocation9 + $0xa40] sm:$0xff]
    %v789 = vld [vmem:[#allocation9 + $0xa48] sm:$0xff]
    %v790 = vld [vmem:[#allocation9 + $0xa50] sm:$0xff]
    %v791 = vld [vmem:[#allocation9 + $0xa58] sm:$0xff]
    %v792 = vld [vmem:[#allocation9 + $0xa60] sm:$0xff]
    %v793 = vld [vmem:[#allocation9 + $0xa68] sm:$0xff]
    %v794 = vld [vmem:[#allocation9 + $0xa70] sm:$0xff]
    %v795 = vld [vmem:[#allocation9 + $0xa78] sm:$0xff]
    %v796 = vld [vmem:[#allocation9 + $0xa80] sm:$0xff]
    %v797 = vld [vmem:[#allocation9 + $0xa88] sm:$0xff]
    %v798 = vld [vmem:[#allocation9 + $0xa90] sm:$0xff]
    %v799 = vld [vmem:[#allocation9 + $0xa98] sm:$0xff]
    %v800 = vld [vmem:[#allocation9 + $0xaa0] sm:$0xff]
    %v801 = vld [vmem:[#allocation9 + $0xaa8] sm:$0xff]
    %v802 = vld [vmem:[#allocation9 + $0xab0] sm:$0xff]
    %v803 = vld [vmem:[#allocation9 + $0xab8] sm:$0xff]
    %v804 = vld [vmem:[#allocation9 + $0xac0] sm:$0xff]
    %v805 = vld [vmem:[#allocation9 + $0xac8] sm:$0xff]
    %v806 = vld [vmem:[#allocation9 + $0xad0] sm:$0xff]
    %v807 = vld [vmem:[#allocation9 + $0xad8] sm:$0xff]
    %v808 = vld [vmem:[#allocation9 + $0xae0] sm:$0xff]
    %v809 = vld [vmem:[#allocation9 + $0xae8] sm:$0xff]
    %v810 = vld [vmem:[#allocation9 + $0xaf0] sm:$0xff]
    %v811 = vld [vmem:[#allocation9 + $0xaf8] sm:$0xff]
    %v812 = vld [vmem:[#allocation9 + $0xb00] sm:$0xff]
    %v813 = vld [vmem:[#allocation9 + $0xb08] sm:$0xff]
    %v814 = vld [vmem:[#allocation9 + $0xb10] sm:$0xff]
    %v815 = vld [vmem:[#allocation9 + $0xb18] sm:$0xff]
    %v816 = vld [vmem:[#allocation9 + $0xb20] sm:$0xff]
    %v817 = vld [vmem:[#allocation9 + $0xb28] sm:$0xff]
    %v818 = vld [vmem:[#allocation9 + $0xb30] sm:$0xff]
    %v819 = vld [vmem:[#allocation9 + $0xb38] sm:$0xff]
    %v820 = vld [vmem:[#allocation9 + $0xb40] sm:$0xff]
    %v821 = vld [vmem:[#allocation9 + $0xb48] sm:$0xff]
    %v822 = vld [vmem:[#allocation9 + $0xb50] sm:$0xff]
    %v823 = vld [vmem:[#allocation9 + $0xb58] sm:$0xff]
    %v824 = vld [vmem:[#allocation9 + $0xb60] sm:$0xff]
    %v825 = vld [vmem:[#allocation9 + $0xb68] sm:$0xff]
    %v826 = vld [vmem:[#allocation9 + $0xb70] sm:$0xff]
    %v827 = vld [vmem:[#allocation9 + $0xb78] sm:$0xff]
    %v828 = vld [vmem:[#allocation9 + $0xb80] sm:$0xff]
    %v829 = vld [vmem:[#allocation9 + $0xb88] sm:$0xff]
    %v830 = vld [vmem:[#allocation9 + $0xb90] sm:$0xff]
    %v831 = vld [vmem:[#allocation9 + $0xb98] sm:$0xff]
    %v832 = vld [vmem:[#allocation9 + $0xba0] sm:$0xff]
    %v833 = vld [vmem:[#allocation9 + $0xba8] sm:$0xff]
    %v834 = vld [vmem:[#allocation9 + $0xbb0] sm:$0xff]
    %v835 = vld [vmem:[#allocation9 + $0xbb8] sm:$0xff]
    %v836 = vld [vmem:[#allocation9 + $0xbc0] sm:$0xff]
    %v837 = vld [vmem:[#allocation9 + $0xbc8] sm:$0xff]
    %v838 = vld [vmem:[#allocation9 + $0xbd0] sm:$0xff]
    %v839 = vld [vmem:[#allocation9 + $0xbd8] sm:$0xff]
    %v840 = vld [vmem:[#allocation9 + $0xbe0] sm:$0xff]
    %v841 = vld [vmem:[#allocation9 + $0xbe8] sm:$0xff]
    %v842 = vld [vmem:[#allocation9 + $0xbf0] sm:$0xff]
    %v843 = vld [vmem:[#allocation9 + $0xbf8] sm:$0xff]
    %v844 = vld [vmem:[#allocation9 + $0xc00] sm:$0xff]
    %v845 = vld [vmem:[#allocation9 + $0xc08] sm:$0xff]
    %v846 = vld [vmem:[#allocation9 + $0xc10] sm:$0xff]
    %v847 = vld [vmem:[#allocation9 + $0xc18] sm:$0xff]
    %v848 = vld [vmem:[#allocation9 + $0xc20] sm:$0xff]
    %v849 = vld [vmem:[#allocation9 + $0xc28] sm:$0xff]
    %v850 = vld [vmem:[#allocation9 + $0xc30] sm:$0xff]
    %v851 = vld [vmem:[#allocation9 + $0xc38] sm:$0xff]
    %v852 = vld [vmem:[#allocation9 + $0xc40] sm:$0xff]
    %v853 = vld [vmem:[#allocation9 + $0xc48] sm:$0xff]
    %v854 = vld [vmem:[#allocation9 + $0xc50] sm:$0xff]
    %v855 = vld [vmem:[#allocation9 + $0xc58] sm:$0xff]
    %v856 = vld [vmem:[#allocation9 + $0xc60] sm:$0xff]
    %v857 = vld [vmem:[#allocation9 + $0xc68] sm:$0xff]
    %v858 = vld [vmem:[#allocation9 + $0xc70] sm:$0xff]
    %v859 = vld [vmem:[#allocation9 + $0xc78] sm:$0xff]
    %v860 = vld [vmem:[#allocation9 + $0xc80] sm:$0xff]
    %v861 = vld [vmem:[#allocation9 + $0xc88] sm:$0xff]
    %v862 = vld [vmem:[#allocation9 + $0xc90] sm:$0xff]
    %v863 = vld [vmem:[#allocation9 + $0xc98] sm:$0xff]
    %v864 = vld [vmem:[#allocation9 + $0xca0] sm:$0xff]
    %v865 = vld [vmem:[#allocation9 + $0xca8] sm:$0xff]
    %v866 = vld [vmem:[#allocation9 + $0xcb0] sm:$0xff]
    %v867 = vld [vmem:[#allocation9 + $0xcb8] sm:$0xff]
    %v868 = vld [vmem:[#allocation9 + $0xcc0] sm:$0xff]
    %v869 = vld [vmem:[#allocation9 + $0xcc8] sm:$0xff]
    %v870 = vld [vmem:[#allocation9 + $0xcd0] sm:$0xff]
    %v871 = vld [vmem:[#allocation9 + $0xcd8] sm:$0xff]
    %v872 = vld [vmem:[#allocation9 + $0xce0] sm:$0xff]
    %v873 = vld [vmem:[#allocation9 + $0xce8] sm:$0xff]
    %v874 = vld [vmem:[#allocation9 + $0xcf0] sm:$0xff]
    %v875 = vld [vmem:[#allocation9 + $0xcf8] sm:$0xff]
    %v876 = vld [vmem:[#allocation9 + $0xd00] sm:$0xff]
    %v877 = vld [vmem:[#allocation9 + $0xd08] sm:$0xff]
    %v878 = vld [vmem:[#allocation9 + $0xd10] sm:$0xff]
    %v879 = vld [vmem:[#allocation9 + $0xd18] sm:$0xff]
    %v880 = vld [vmem:[#allocation9 + $0xd20] sm:$0xff]
    %v881 = vld [vmem:[#allocation9 + $0xd28] sm:$0xff]
    %v882 = vld [vmem:[#allocation9 + $0xd30] sm:$0xff]
    %v883 = vld [vmem:[#allocation9 + $0xd38] sm:$0xff]
    %v884 = vld [vmem:[#allocation9 + $0xd40] sm:$0xff]
    %v885 = vld [vmem:[#allocation9 + $0xd48] sm:$0xff]
    %v886 = vld [vmem:[#allocation9 + $0xd50] sm:$0xff]
    %v887 = vld [vmem:[#allocation9 + $0xd58] sm:$0xff]
    %v888 = vld [vmem:[#allocation9 + $0xd60] sm:$0xff]
    %v889 = vld [vmem:[#allocation9 + $0xd68] sm:$0xff]
    %v890 = vld [vmem:[#allocation9 + $0xd70] sm:$0xff]
    %v891 = vld [vmem:[#allocation9 + $0xd78] sm:$0xff]
    %v892 = vld [vmem:[#allocation9 + $0xd80] sm:$0xff]
    %v893 = vld [vmem:[#allocation9 + $0xd88] sm:$0xff]
    %v894 = vld [vmem:[#allocation9 + $0xd90] sm:$0xff]
    %v895 = vld [vmem:[#allocation9 + $0xd98] sm:$0xff]
    %v896 = vld [vmem:[#allocation9 + $0xda0] sm:$0xff]
    %v897 = vld [vmem:[#allocation9 + $0xda8] sm:$0xff]
    %v898 = vld [vmem:[#allocation9 + $0xdb0] sm:$0xff]
    %v899 = vld [vmem:[#allocation9 + $0xdb8] sm:$0xff]
    %v900 = vld [vmem:[#allocation9 + $0xdc0] sm:$0xff]
    %v901 = vld [vmem:[#allocation9 + $0xdc8] sm:$0xff]
    %v902 = vld [vmem:[#allocation9 + $0xdd0] sm:$0xff]
    %v903 = vld [vmem:[#allocation9 + $0xdd8] sm:$0xff]
    %v904 = vld [vmem:[#allocation9 + $0xde0] sm:$0xff]
    %v905 = vld [vmem:[#allocation9 + $0xde8] sm:$0xff]
    %v906 = vld [vmem:[#allocation9 + $0xdf0] sm:$0xff]
    %v907 = vld [vmem:[#allocation9 + $0xdf8] sm:$0xff]
    %v908 = vld [vmem:[#allocation9 + $0xe00] sm:$0xff]
    %v909 = vld [vmem:[#allocation9 + $0xe08] sm:$0xff]
    %v910 = vld [vmem:[#allocation9 + $0xe10] sm:$0xff]
    %v911 = vld [vmem:[#allocation9 + $0xe18] sm:$0xff]
    %v912 = vld [vmem:[#allocation9 + $0xe20] sm:$0xff]
    %v913 = vld [vmem:[#allocation9 + $0xe28] sm:$0xff]
    %v914 = vld [vmem:[#allocation9 + $0xe30] sm:$0xff]
    %v915 = vld [vmem:[#allocation9 + $0xe38] sm:$0xff]
    %v916 = vld [vmem:[#allocation9 + $0xe40] sm:$0xff]
    %v917 = vld [vmem:[#allocation9 + $0xe48] sm:$0xff]
    %v918 = vld [vmem:[#allocation9 + $0xe50] sm:$0xff]
    %v919 = vld [vmem:[#allocation9 + $0xe58] sm:$0xff]
    %v920 = vld [vmem:[#allocation9 + $0xe60] sm:$0xff]
    %v921 = vld [vmem:[#allocation9 + $0xe68] sm:$0xff]
    %v922 = vld [vmem:[#allocation9 + $0xe70] sm:$0xff]
    %v923 = vld [vmem:[#allocation9 + $0xe78] sm:$0xff]
    %v924 = vld [vmem:[#allocation9 + $0xe80] sm:$0xff]
    %v925 = vld [vmem:[#allocation9 + $0xe88] sm:$0xff]
    %v926 = vld [vmem:[#allocation9 + $0xe90] sm:$0xff]
    %v927 = vld [vmem:[#allocation9 + $0xe98] sm:$0xff]
    %v928 = vld [vmem:[#allocation9 + $0xea0] sm:$0xff]
    %v929 = vld [vmem:[#allocation9 + $0xea8] sm:$0xff]
    %v930 = vld [vmem:[#allocation9 + $0xeb0] sm:$0xff]
    %v931 = vld [vmem:[#allocation9 + $0xeb8] sm:$0xff]
    %v932 = vld [vmem:[#allocation9 + $0xec0] sm:$0xff]
    %v933 = vld [vmem:[#allocation9 + $0xec8] sm:$0xff]
    %v934 = vld [vmem:[#allocation9 + $0xed0] sm:$0xff]
    %v935 = vld [vmem:[#allocation9 + $0xed8] sm:$0xff]
    %v936 = vld [vmem:[#allocation9 + $0xee0] sm:$0xff]
    %v937 = vld [vmem:[#allocation9 + $0xee8] sm:$0xff]
    %v938 = vld [vmem:[#allocation9 + $0xef0] sm:$0xff]
    %v939 = vld [vmem:[#allocation9 + $0xef8] sm:$0xff]
    %v940 = vld [vmem:[#allocation9 + $0xf00] sm:$0xff]
    %v941 = vld [vmem:[#allocation9 + $0xf08] sm:$0xff]
    %v942 = vld [vmem:[#allocation9 + $0xf10] sm:$0xff]
    %v943 = vld [vmem:[#allocation9 + $0xf18] sm:$0xff]
    %v944 = vld [vmem:[#allocation9 + $0xf20] sm:$0xff]
    %v945 = vld [vmem:[#allocation9 + $0xf28] sm:$0xff]
    %v946 = vld [vmem:[#allocation9 + $0xf30] sm:$0xff]
    %v947 = vld [vmem:[#allocation9 + $0xf38] sm:$0xff]
    %v948 = vld [vmem:[#allocation9 + $0xf40] sm:$0xff]
    %v949 = vld [vmem:[#allocation9 + $0xf48] sm:$0xff]
    %v950 = vld [vmem:[#allocation9 + $0xf50] sm:$0xff]
    %v951 = vld [vmem:[#allocation9 + $0xf58] sm:$0xff]
    %v952 = vld [vmem:[#allocation9 + $0xf60] sm:$0xff]
    %v953 = vld [vmem:[#allocation9 + $0xf68] sm:$0xff]
    %v954 = vld [vmem:[#allocation9 + $0xf70] sm:$0xff]
    %v955 = vld [vmem:[#allocation9 + $0xf78] sm:$0xff]
    %v956 = vld [vmem:[#allocation9 + $0xf80] sm:$0xff]
    %v957 = vld [vmem:[#allocation9 + $0xf88] sm:$0xff]
    %v958 = vld [vmem:[#allocation9 + $0xf90] sm:$0xff]
    %v959 = vld [vmem:[#allocation9 + $0xf98] sm:$0xff]
    %v960 = vld [vmem:[#allocation9 + $0xfa0] sm:$0xff]
    %v961 = vld [vmem:[#allocation9 + $0xfa8] sm:$0xff]
    %v962 = vld [vmem:[#allocation9 + $0xfb0] sm:$0xff]
    %v963 = vld [vmem:[#allocation9 + $0xfb8] sm:$0xff]
    %v964 = vld [vmem:[#allocation9 + $0xfc0] sm:$0xff]
    %v965 = vld [vmem:[#allocation9 + $0xfc8] sm:$0xff]
    %v966 = vld [vmem:[#allocation9 + $0xfd0] sm:$0xff]
    %v967 = vld [vmem:[#allocation9 + $0xfd8] sm:$0xff]
    %v968 = vld [vmem:[#allocation9 + $0xfe0] sm:$0xff]
    %v969 = vld [vmem:[#allocation9 + $0xfe8] sm:$0xff]
    %v970 = vld [vmem:[#allocation9 + $0xff0] sm:$0xff]
    %v971 = vld [vmem:[#allocation9 + $0xff8] sm:$0xff]
    %v972 = vld [vmem:[#allocation11] sm:$0xff]
    %v974 = vlaneseq
    %v975 = vshrl.u32 %v974, 7
    %v976 = vsub.s32 0, %v975
    %v977 = vrot.slane %v972, %v976
    %v978 = vlaneseq
    %v979 = vshrl.u32 %v978, 7
    %v980 = vsub.s32 1, %v979
    %v981 = vrot.slane %v972, %v980
    %v982 = vlaneseq
    %v983 = vshrl.u32 %v982, 7
    %v984 = vsub.s32 2, %v983
    %v985 = vrot.slane %v972, %v984
    %v986 = vlaneseq
    %v987 = vshrl.u32 %v986, 7
    %v988 = vsub.s32 3, %v987
    %v989 = vrot.slane %v972, %v988
    %v990 = vlaneseq
    %v991 = vshrl.u32 %v990, 7
    %v992 = vsub.s32 4, %v991
    %v993 = vrot.slane %v972, %v992
    %v994 = vlaneseq
    %v995 = vshrl.u32 %v994, 7
    %v996 = vsub.s32 5, %v995
    %v997 = vrot.slane %v972, %v996
    %v998 = vlaneseq
    %v999 = vshrl.u32 %v998, 7
    %v1000 = vsub.s32 6, %v999
    %v1001 = vrot.slane %v972, %v1000
    %v1002 = vlaneseq
    %v1003 = vshrl.u32 %v1002, 7
    %v1004 = vsub.s32 7, %v1003
    %v1005 = vrot.slane %v972, %v1004
    %1014 = vmatprep.subr.mxu0 %v461
    %1015 = vmatpush1.msra.mxu0 %v460
    %1016 = vmatprep.subr.mxu0 %v469
    %1017 = vmatpush1.msra.mxu0 %v468
    %1018 = vmatprep.subr.mxu0 %v477
    %1019 = vmatpush1.msra.mxu0 %v476
    %1020 = vmatprep.subr.mxu0 %v485
    %1021 = vmatpush1.msra.mxu0 %v484
    %1022 = vmatprep.subr.mxu0 %v493
    %1023 = vmatpush1.msra.mxu0 %v492
    %1024 = vmatprep.subr.mxu0 %v501
    %1025 = vmatpush1.msra.mxu0 %v500
    %1026 = vmatprep.subr.mxu0 %v509
    %1027 = vmatpush1.msra.mxu0 %v508
    %1028 = vmatprep.subr.mxu0 %v517
    %1029 = vmatpush1.msra.mxu0 %v516
    %1030 = vmatprep.subr.mxu0 %v525
    %1031 = vmatpush1.msra.mxu0 %v524
    %1032 = vmatprep.subr.mxu0 %v533
    %1033 = vmatpush1.msra.mxu0 %v532
    %1034 = vmatprep.subr.mxu0 %v541
    %1035 = vmatpush1.msra.mxu0 %v540
    %1036 = vmatprep.subr.mxu0 %v549
    %1037 = vmatpush1.msra.mxu0 %v548
    %1038 = vmatprep.subr.mxu0 %v557
    %1039 = vmatpush1.msra.mxu0 %v556
    %1040 = vmatprep.subr.mxu0 %v565
    %1041 = vmatpush1.msra.mxu0 %v564
    %1042 = vmatprep.subr.mxu0 %v573
    %1043 = vmatpush1.msra.mxu0 %v572
    %1044 = vmatprep.subr.mxu0 %v581
    %1045 = vmatpush1.msra.mxu0 %v580
    %1046 = vmatprep.subr.mxu0 %v589
    %1047 = vmatpush1.msra.mxu0 %v588
    %1048 = vmatprep.subr.mxu0 %v597
    %1049 = vmatpush1.msra.mxu0 %v596
    %1050 = vmatprep.subr.mxu0 %v605
    %1051 = vmatpush1.msra.mxu0 %v604
    %1052 = vmatprep.subr.mxu0 %v613
    %1053 = vmatpush1.msra.mxu0 %v612
    %1054 = vmatprep.subr.mxu0 %v621
    %1055 = vmatpush1.msra.mxu0 %v620
    %1056 = vmatprep.subr.mxu0 %v629
    %1057 = vmatpush1.msra.mxu0 %v628
    %1058 = vmatprep.subr.mxu0 %v637
    %1059 = vmatpush1.msra.mxu0 %v636
    %1060 = vmatprep.subr.mxu0 %v645
    %1061 = vmatpush1.msra.mxu0 %v644
    %1062 = vmatprep.subr.mxu0 %v653
    %1063 = vmatpush1.msra.mxu0 %v652
    %1064 = vmatprep.subr.mxu0 %v661
    %1065 = vmatpush1.msra.mxu0 %v660
    %1066 = vmatprep.subr.mxu0 %v669
    %1067 = vmatpush1.msra.mxu0 %v668
    %1068 = vmatprep.subr.mxu0 %v677
    %1069 = vmatpush1.msra.mxu0 %v676
    %1070 = vmatprep.subr.mxu0 %v685
    %1071 = vmatpush1.msra.mxu0 %v684
    %1072 = vmatprep.subr.mxu0 %v693
    %1073 = vmatpush1.msra.mxu0 %v692
    %1074 = vmatprep.subr.mxu0 %v701
    %1075 = vmatpush1.msra.mxu0 %v700
    %1076 = vmatprep.subr.mxu0 %v709
    %1077 = vmatpush1.msra.mxu0 %v708
    %1078 = vmatprep.mubr.f32.mxu0 %v453
    %1079 = vmatmul.mubr.f32.gmra.mrb[0].mxu0 %v452
    %v1080 = vpop.f32.mrb[0].mxu0
    %v1081 = vadd.f32 %v977, %v1080
    %v1082 = vpop.f32.mrb[0].mxu0
    %v1083 = vadd.f32 %v981, %v1082
    %1084 = vmatprep.mubr.f32.mxu0 %v457
    %1085 = vmatmul.mubr.f32.gmra.mrb[0].mxu0 %v456
    %v1086 = vpop.f32.mrb[0].mxu0
    %v1087 = vadd.f32 %v977, %v1086
    %v1088 = vpop.f32.mrb[0].mxu0
    %v1089 = vadd.f32 %v981, %v1088
    %1090 = vdwg.mxu0
    %1091 = vmatprep.subr.mxu0 %v717
    %1092 = vmatpush1.msra.mxu0 %v716
    %1093 = vmatprep.subr.mxu0 %v725
    %1094 = vmatpush1.msra.mxu0 %v724
    %1095 = vmatprep.subr.mxu0 %v733
    %1096 = vmatpush1.msra.mxu0 %v732
    %1097 = vmatprep.subr.mxu0 %v741
    %1098 = vmatpush1.msra.mxu0 %v740
    %1099 = vmatprep.subr.mxu0 %v749
    %1100 = vmatpush1.msra.mxu0 %v748
    %1101 = vmatprep.subr.mxu0 %v757
    %1102 = vmatpush1.msra.mxu0 %v756
    %1103 = vmatprep.subr.mxu0 %v765
    %1104 = vmatpush1.msra.mxu0 %v764
    %1105 = vmatprep.subr.mxu0 %v773
    %1106 = vmatpush1.msra.mxu0 %v772
    %1107 = vmatprep.subr.mxu0 %v781
    %1108 = vmatpush1.msra.mxu0 %v780
    %1109 = vmatprep.subr.mxu0 %v789
    %1110 = vmatpush1.msra.mxu0 %v788
    %1111 = vmatprep.subr.mxu0 %v797
    %1112 = vmatpush1.msra.mxu0 %v796
    %1113 = vmatprep.subr.mxu0 %v805
    %1114 = vmatpush1.msra.mxu0 %v804
    %1115 = vmatprep.subr.mxu0 %v813
    %1116 = vmatpush1.msra.mxu0 %v812
    %1117 = vmatprep.subr.mxu0 %v821
    %1118 = vmatpush1.msra.mxu0 %v820
    %1119 = vmatprep.subr.mxu0 %v829
    %1120 = vmatpush1.msra.mxu0 %v828
    %1121 = vmatprep.subr.mxu0 %v837
    %1122 = vmatpush1.msra.mxu0 %v836
    %1123 = vmatprep.subr.mxu0 %v845
    %1124 = vmatpush1.msra.mxu0 %v844
    %1125 = vmatprep.subr.mxu0 %v853
    %1126 = vmatpush1.msra.mxu0 %v852
    %1127 = vmatprep.subr.mxu0 %v861
    %1128 = vmatpush1.msra.mxu0 %v860
    %1129 = vmatprep.subr.mxu0 %v869
    %1130 = vmatpush1.msra.mxu0 %v868
    %1131 = vmatprep.subr.mxu0 %v877
    %1132 = vmatpush1.msra.mxu0 %v876
    %1133 = vmatprep.subr.mxu0 %v885
    %1134 = vmatpush1.msra.mxu0 %v884
    %1135 = vmatprep.subr.mxu0 %v893
    %1136 = vmatpush1.msra.mxu0 %v892
    %1137 = vmatprep.subr.mxu0 %v901
    %1138 = vmatpush1.msra.mxu0 %v900
    %1139 = vmatprep.subr.mxu0 %v909
    %1140 = vmatpush1.msra.mxu0 %v908
    %1141 = vmatprep.subr.mxu0 %v917
    %1142 = vmatpush1.msra.mxu0 %v916
    %1143 = vmatprep.subr.mxu0 %v925
    %1144 = vmatpush1.msra.mxu0 %v924
    %1145 = vmatprep.subr.mxu0 %v933
    %1146 = vmatpush1.msra.mxu0 %v932
    %1147 = vmatprep.subr.mxu0 %v941
    %1148 = vmatpush1.msra.mxu0 %v940
    %1149 = vmatprep.subr.mxu0 %v949
    %1150 = vmatpush1.msra.mxu0 %v948
    %1151 = vmatprep.subr.mxu0 %v957
    %1152 = vmatpush1.msra.mxu0 %v956
    %1153 = vmatprep.subr.mxu0 %v965
    %1154 = vmatpush1.msra.mxu0 %v964
    %1155 = vmatprep.mubr.f32.mxu0 %v455
    %1156 = vmatmul.mubr.f32.gmra.mrb[0].mxu0 %v454
    %v1157 = vpop.f32.mrb[0].mxu0
    %v1158 = vadd.f32 %v1081, %v1157
    %v1159 = vpop.f32.mrb[0].mxu0
    %v1160 = vadd.f32 %v1083, %v1159
    %1161 = vmatprep.mubr.f32.mxu0 %v459
    %1162 = vmatmul.mubr.f32.gmra.mrb[0].mxu0 %v458
    %v1163 = vpop.f32.mrb[0].mxu0
    %v1164 = vadd.f32 %v1087, %v1163
    %v1165 = vpop.f32.mrb[0].mxu0
    %v1166 = vadd.f32 %v1089, %v1165
    %1167 = vdwg.mxu0
    %1168 = vmatprep.subr.mxu0 %v463
    %1169 = vmatpush1.msra.mxu0 %v462
    %1170 = vmatprep.subr.mxu0 %v471
    %1171 = vmatpush1.msra.mxu0 %v470
    %1172 = vmatprep.subr.mxu0 %v479
    %1173 = vmatpush1.msra.mxu0 %v478
    %1174 = vmatprep.subr.mxu0 %v487
    %1175 = vmatpush1.msra.mxu0 %v486
    %1176 = vmatprep.subr.mxu0 %v495
    %1177 = vmatpush1.msra.mxu0 %v494
    %1178 = vmatprep.subr.mxu0 %v503
    %1179 = vmatpush1.msra.mxu0 %v502
    %1180 = vmatprep.subr.mxu0 %v511
    %1181 = vmatpush1.msra.mxu0 %v510
    %1182 = vmatprep.subr.mxu0 %v519
    %1183 = vmatpush1.msra.mxu0 %v518
    %1184 = vmatprep.subr.mxu0 %v527
    %1185 = vmatpush1.msra.mxu0 %v526
    %1186 = vmatprep.subr.mxu0 %v535
    %1187 = vmatpush1.msra.mxu0 %v534
    %1188 = vmatprep.subr.mxu0 %v543
    %1189 = vmatpush1.msra.mxu0 %v542
    %1190 = vmatprep.subr.mxu0 %v551
    %1191 = vmatpush1.msra.mxu0 %v550
    %1192 = vmatprep.subr.mxu0 %v559
    %1193 = vmatpush1.msra.mxu0 %v558
    %1194 = vmatprep.subr.mxu0 %v567
    %1195 = vmatpush1.msra.mxu0 %v566
    %1196 = vmatprep.subr.mxu0 %v575
    %1197 = vmatpush1.msra.mxu0 %v574
    %1198 = vmatprep.subr.mxu0 %v583
    %1199 = vmatpush1.msra.mxu0 %v582
    %1200 = vmatprep.subr.mxu0 %v591
    %1201 = vmatpush1.msra.mxu0 %v590
    %1202 = vmatprep.subr.mxu0 %v599
    %1203 = vmatpush1.msra.mxu0 %v598
    %1204 = vmatprep.subr.mxu0 %v607
    %1205 = vmatpush1.msra.mxu0 %v606
    %1206 = vmatprep.subr.mxu0 %v615
    %1207 = vmatpush1.msra.mxu0 %v614
    %1208 = vmatprep.subr.mxu0 %v623
    %1209 = vmatpush1.msra.mxu0 %v622
    %1210 = vmatprep.subr.mxu0 %v631
    %1211 = vmatpush1.msra.mxu0 %v630
    %1212 = vmatprep.subr.mxu0 %v639
    %1213 = vmatpush1.msra.mxu0 %v638
    %1214 = vmatprep.subr.mxu0 %v647
    %1215 = vmatpush1.msra.mxu0 %v646
    %1216 = vmatprep.subr.mxu0 %v655
    %1217 = vmatpush1.msra.mxu0 %v654
    %1218 = vmatprep.subr.mxu0 %v663
    %1219 = vmatpush1.msra.mxu0 %v662
    %1220 = vmatprep.subr.mxu0 %v671
    %1221 = vmatpush1.msra.mxu0 %v670
    %1222 = vmatprep.subr.mxu0 %v679
    %1223 = vmatpush1.msra.mxu0 %v678
    %1224 = vmatprep.subr.mxu0 %v687
    %1225 = vmatpush1.msra.mxu0 %v686
    %1226 = vmatprep.subr.mxu0 %v695
    %1227 = vmatpush1.msra.mxu0 %v694
    %1228 = vmatprep.subr.mxu0 %v703
    %1229 = vmatpush1.msra.mxu0 %v702
    %1230 = vmatprep.subr.mxu0 %v711
    %1231 = vmatpush1.msra.mxu0 %v710
    %1232 = vmatprep.mubr.f32.mxu0 %v453
    %1233 = vmatmul.mubr.f32.gmra.mrb[0].mxu0 %v452
    %v1234 = vpop.f32.mrb[0].mxu0
    %v1235 = vadd.f32 %v985, %v1234
    %v1236 = vpop.f32.mrb[0].mxu0
    %v1237 = vadd.f32 %v989, %v1236
    %1238 = vmatprep.mubr.f32.mxu0 %v457
    %1239 = vmatmul.mubr.f32.gmra.mrb[0].mxu0 %v456
    %v1240 = vpop.f32.mrb[0].mxu0
    %v1241 = vadd.f32 %v985, %v1240
    %v1242 = vpop.f32.mrb[0].mxu0
    %v1243 = vadd.f32 %v989, %v1242
    %1244 = vdwg.mxu0
    %1245 = vmatprep.subr.mxu0 %v719
    %1246 = vmatpush1.msra.mxu0 %v718
    %1247 = vmatprep.subr.mxu0 %v727
    %1248 = vmatpush1.msra.mxu0 %v726
    %1249 = vmatprep.subr.mxu0 %v735
    %1250 = vmatpush1.msra.mxu0 %v734
    %1251 = vmatprep.subr.mxu0 %v743
    %1252 = vmatpush1.msra.mxu0 %v742
    %1253 = vmatprep.subr.mxu0 %v751
    %1254 = vmatpush1.msra.mxu0 %v750
    %1255 = vmatprep.subr.mxu0 %v759
    %1256 = vmatpush1.msra.mxu0 %v758
    %1257 = vmatprep.subr.mxu0 %v767
    %1258 = vmatpush1.msra.mxu0 %v766
    %1259 = vmatprep.subr.mxu0 %v775
    %1260 = vmatpush1.msra.mxu0 %v774
    %1261 = vmatprep.subr.mxu0 %v783
    %1262 = vmatpush1.msra.mxu0 %v782
    %1263 = vmatprep.subr.mxu0 %v791
    %1264 = vmatpush1.msra.mxu0 %v790
    %1265 = vmatprep.subr.mxu0 %v799
    %1266 = vmatpush1.msra.mxu0 %v798
    %1267 = vmatprep.subr.mxu0 %v807
    %1268 = vmatpush1.msra.mxu0 %v806
    %1269 = vmatprep.subr.mxu0 %v815
    %1270 = vmatpush1.msra.mxu0 %v814
    %1271 = vmatprep.subr.mxu0 %v823
    %1272 = vmatpush1.msra.mxu0 %v822
    %1273 = vmatprep.subr.mxu0 %v831
    %1274 = vmatpush1.msra.mxu0 %v830
    %1275 = vmatprep.subr.mxu0 %v839
    %1276 = vmatpush1.msra.mxu0 %v838
    %1277 = vmatprep.subr.mxu0 %v847
    %1278 = vmatpush1.msra.mxu0 %v846
    %1279 = vmatprep.subr.mxu0 %v855
    %1280 = vmatpush1.msra.mxu0 %v854
    %1281 = vmatprep.subr.mxu0 %v863
    %1282 = vmatpush1.msra.mxu0 %v862
    %1283 = vmatprep.subr.mxu0 %v871
    %1284 = vmatpush1.msra.mxu0 %v870
    %1285 = vmatprep.subr.mxu0 %v879
    %1286 = vmatpush1.msra.mxu0 %v878
    %1287 = vmatprep.subr.mxu0 %v887
    %1288 = vmatpush1.msra.mxu0 %v886
    %1289 = vmatprep.subr.mxu0 %v895
    %1290 = vmatpush1.msra.mxu0 %v894
    %1291 = vmatprep.subr.mxu0 %v903
    %1292 = vmatpush1.msra.mxu0 %v902
    %1293 = vmatprep.subr.mxu0 %v911
    %1294 = vmatpush1.msra.mxu0 %v910
    %1295 = vmatprep.subr.mxu0 %v919
    %1296 = vmatpush1.msra.mxu0 %v918
    %1297 = vmatprep.subr.mxu0 %v927
    %1298 = vmatpush1.msra.mxu0 %v926
    %1299 = vmatprep.subr.mxu0 %v935
    %1300 = vmatpush1.msra.mxu0 %v934
    %1301 = vmatprep.subr.mxu0 %v943
    %1302 = vmatpush1.msra.mxu0 %v942
    %1303 = vmatprep.subr.mxu0 %v951
    %1304 = vmatpush1.msra.mxu0 %v950
    %1305 = vmatprep.subr.mxu0 %v959
    %1306 = vmatpush1.msra.mxu0 %v958
    %1307 = vmatprep.subr.mxu0 %v967
    %1308 = vmatpush1.msra.mxu0 %v966
    %1309 = vmatprep.mubr.f32.mxu0 %v455
    %1310 = vmatmul.mubr.f32.gmra.mrb[0].mxu0 %v454
    %v1311 = vpop.f32.mrb[0].mxu0
    %v1312 = vadd.f32 %v1235, %v1311
    %v1313 = vpop.f32.mrb[0].mxu0
    %v1314 = vadd.f32 %v1237, %v1313
    %1315 = vmatprep.mubr.f32.mxu0 %v459
    %1316 = vmatmul.mubr.f32.gmra.mrb[0].mxu0 %v458
    %v1317 = vpop.f32.mrb[0].mxu0
    %v1318 = vadd.f32 %v1241, %v1317
    %v1319 = vpop.f32.mrb[0].mxu0
    %v1320 = vadd.f32 %v1243, %v1319
    %1321 = vdwg.mxu0
    %1322 = vmatprep.subr.mxu0 %v465
    %1323 = vmatpush1.msra.mxu0 %v464
    %1324 = vmatprep.subr.mxu0 %v473
    %1325 = vmatpush1.msra.mxu0 %v472
    %1326 = vmatprep.subr.mxu0 %v481
    %1327 = vmatpush1.msra.mxu0 %v480
    %1328 = vmatprep.subr.mxu0 %v489
    %1329 = vmatpush1.msra.mxu0 %v488
    %1330 = vmatprep.subr.mxu0 %v497
    %1331 = vmatpush1.msra.mxu0 %v496
    %1332 = vmatprep.subr.mxu0 %v505
    %1333 = vmatpush1.msra.mxu0 %v504
    %1334 = vmatprep.subr.mxu0 %v513
    %1335 = vmatpush1.msra.mxu0 %v512
    %1336 = vmatprep.subr.mxu0 %v521
    %1337 = vmatpush1.msra.mxu0 %v520
    %1338 = vmatprep.subr.mxu0 %v529
    %1339 = vmatpush1.msra.mxu0 %v528
    %1340 = vmatprep.subr.mxu0 %v537
    %1341 = vmatpush1.msra.mxu0 %v536
    %1342 = vmatprep.subr.mxu0 %v545
    %1343 = vmatpush1.msra.mxu0 %v544
    %1344 = vmatprep.subr.mxu0 %v553
    %1345 = vmatpush1.msra.mxu0 %v552
    %1346 = vmatprep.subr.mxu0 %v561
    %1347 = vmatpush1.msra.mxu0 %v560
    %1348 = vmatprep.subr.mxu0 %v569
    %1349 = vmatpush1.msra.mxu0 %v568
    %1350 = vmatprep.subr.mxu0 %v577
    %1351 = vmatpush1.msra.mxu0 %v576
    %1352 = vmatprep.subr.mxu0 %v585
    %1353 = vmatpush1.msra.mxu0 %v584
    %1354 = vmatprep.subr.mxu0 %v593
    %1355 = vmatpush1.msra.mxu0 %v592
    %1356 = vmatprep.subr.mxu0 %v601
    %1357 = vmatpush1.msra.mxu0 %v600
    %1358 = vmatprep.subr.mxu0 %v609
    %1359 = vmatpush1.msra.mxu0 %v608
    %1360 = vmatprep.subr.mxu0 %v617
    %1361 = vmatpush1.msra.mxu0 %v616
    %1362 = vmatprep.subr.mxu0 %v625
    %1363 = vmatpush1.msra.mxu0 %v624
    %1364 = vmatprep.subr.mxu0 %v633
    %1365 = vmatpush1.msra.mxu0 %v632
    %1366 = vmatprep.subr.mxu0 %v641
    %1367 = vmatpush1.msra.mxu0 %v640
    %1368 = vmatprep.subr.mxu0 %v649
    %1369 = vmatpush1.msra.mxu0 %v648
    %1370 = vmatprep.subr.mxu0 %v657
    %1371 = vmatpush1.msra.mxu0 %v656
    %1372 = vmatprep.subr.mxu0 %v665
    %1373 = vmatpush1.msra.mxu0 %v664
    %1374 = vmatprep.subr.mxu0 %v673
    %1375 = vmatpush1.msra.mxu0 %v672
    %1376 = vmatprep.subr.mxu0 %v681
    %1377 = vmatpush1.msra.mxu0 %v680
    %1378 = vmatprep.subr.mxu0 %v689
    %1379 = vmatpush1.msra.mxu0 %v688
    %1380 = vmatprep.subr.mxu0 %v697
    %1381 = vmatpush1.msra.mxu0 %v696
    %1382 = vmatprep.subr.mxu0 %v705
    %1383 = vmatpush1.msra.mxu0 %v704
    %1384 = vmatprep.subr.mxu0 %v713
    %1385 = vmatpush1.msra.mxu0 %v712
    %1386 = vmatprep.mubr.f32.mxu0 %v453
    %1387 = vmatmul.mubr.f32.gmra.mrb[0].mxu0 %v452
    %v1388 = vpop.f32.mrb[0].mxu0
    %v1389 = vadd.f32 %v993, %v1388
    %v1390 = vpop.f32.mrb[0].mxu0
    %v1391 = vadd.f32 %v997, %v1390
    %1392 = vmatprep.mubr.f32.mxu0 %v457
    %1393 = vmatmul.mubr.f32.gmra.mrb[0].mxu0 %v456
    %v1394 = vpop.f32.mrb[0].mxu0
    %v1395 = vadd.f32 %v993, %v1394
    %v1396 = vpop.f32.mrb[0].mxu0
    %v1397 = vadd.f32 %v997, %v1396
    %1398 = vdwg.mxu0
    %1399 = vmatprep.subr.mxu0 %v721
    %1400 = vmatpush1.msra.mxu0 %v720
    %1401 = vmatprep.subr.mxu0 %v729
    %1402 = vmatpush1.msra.mxu0 %v728
    %1403 = vmatprep.subr.mxu0 %v737
    %1404 = vmatpush1.msra.mxu0 %v736
    %1405 = vmatprep.subr.mxu0 %v745
    %1406 = vmatpush1.msra.mxu0 %v744
    %1407 = vmatprep.subr.mxu0 %v753
    %1408 = vmatpush1.msra.mxu0 %v752
    %1409 = vmatprep.subr.mxu0 %v761
    %1410 = vmatpush1.msra.mxu0 %v760
    %1411 = vmatprep.subr.mxu0 %v769
    %1412 = vmatpush1.msra.mxu0 %v768
    %1413 = vmatprep.subr.mxu0 %v777
    %1414 = vmatpush1.msra.mxu0 %v776
    %1415 = vmatprep.subr.mxu0 %v785
    %1416 = vmatpush1.msra.mxu0 %v784
    %1417 = vmatprep.subr.mxu0 %v793
    %1418 = vmatpush1.msra.mxu0 %v792
    %1419 = vmatprep.subr.mxu0 %v801
    %1420 = vmatpush1.msra.mxu0 %v800
    %1421 = vmatprep.subr.mxu0 %v809
    %1422 = vmatpush1.msra.mxu0 %v808
    %1423 = vmatprep.subr.mxu0 %v817
    %1424 = vmatpush1.msra.mxu0 %v816
    %1425 = vmatprep.subr.mxu0 %v825
    %1426 = vmatpush1.msra.mxu0 %v824
    %1427 = vmatprep.subr.mxu0 %v833
    %1428 = vmatpush1.msra.mxu0 %v832
    %1429 = vmatprep.subr.mxu0 %v841
    %1430 = vmatpush1.msra.mxu0 %v840
    %1431 = vmatprep.subr.mxu0 %v849
    %1432 = vmatpush1.msra.mxu0 %v848
    %1433 = vmatprep.subr.mxu0 %v857
    %1434 = vmatpush1.msra.mxu0 %v856
    %1435 = vmatprep.subr.mxu0 %v865
    %1436 = vmatpush1.msra.mxu0 %v864
    %1437 = vmatprep.subr.mxu0 %v873
    %1438 = vmatpush1.msra.mxu0 %v872
    %1439 = vmatprep.subr.mxu0 %v881
    %1440 = vmatpush1.msra.mxu0 %v880
    %1441 = vmatprep.subr.mxu0 %v889
    %1442 = vmatpush1.msra.mxu0 %v888
    %1443 = vmatprep.subr.mxu0 %v897
    %1444 = vmatpush1.msra.mxu0 %v896
    %1445 = vmatprep.subr.mxu0 %v905
    %1446 = vmatpush1.msra.mxu0 %v904
    %1447 = vmatprep.subr.mxu0 %v913
    %1448 = vmatpush1.msra.mxu0 %v912
    %1449 = vmatprep.subr.mxu0 %v921
    %1450 = vmatpush1.msra.mxu0 %v920
    %1451 = vmatprep.subr.mxu0 %v929
    %1452 = vmatpush1.msra.mxu0 %v928
    %1453 = vmatprep.subr.mxu0 %v937
    %1454 = vmatpush1.msra.mxu0 %v936
    %1455 = vmatprep.subr.mxu0 %v945
    %1456 = vmatpush1.msra.mxu0 %v944
    %1457 = vmatprep.subr.mxu0 %v953
    %1458 = vmatpush1.msra.mxu0 %v952
    %1459 = vmatprep.subr.mxu0 %v961
    %1460 = vmatpush1.msra.mxu0 %v960
    %1461 = vmatprep.subr.mxu0 %v969
    %1462 = vmatpush1.msra.mxu0 %v968
    %1463 = vmatprep.mubr.f32.mxu0 %v455
    %1464 = vmatmul.mubr.f32.gmra.mrb[0].mxu0 %v454
    %v1465 = vpop.f32.mrb[0].mxu0
    %v1466 = vadd.f32 %v1389, %v1465
    %v1467 = vpop.f32.mrb[0].mxu0
    %v1468 = vadd.f32 %v1391, %v1467
    %1469 = vmatprep.mubr.f32.mxu0 %v459
    %1470 = vmatmul.mubr.f32.gmra.mrb[0].mxu0 %v458
    %v1471 = vpop.f32.mrb[0].mxu0
    %v1472 = vadd.f32 %v1395, %v1471
    %v1473 = vpop.f32.mrb[0].mxu0
    %v1474 = vadd.f32 %v1397, %v1473
    %1475 = vdwg.mxu0
    %1476 = vmatprep.subr.mxu0 %v467
    %1477 = vmatpush1.msra.mxu0 %v466
    %1478 = vmatprep.subr.mxu0 %v475
    %1479 = vmatpush1.msra.mxu0 %v474
    %1480 = vmatprep.subr.mxu0 %v483
    %1481 = vmatpush1.msra.mxu0 %v482
    %1482 = vmatprep.subr.mxu0 %v491
    %1483 = vmatpush1.msra.mxu0 %v490
    %1484 = vmatprep.subr.mxu0 %v499
    %1485 = vmatpush1.msra.mxu0 %v498
    %1486 = vmatprep.subr.mxu0 %v507
    %1487 = vmatpush1.msra.mxu0 %v506
    %1488 = vmatprep.subr.mxu0 %v515
    %1489 = vmatpush1.msra.mxu0 %v514
    %1490 = vmatprep.subr.mxu0 %v523
    %1491 = vmatpush1.msra.mxu0 %v522
    %1492 = vmatprep.subr.mxu0 %v531
    %1493 = vmatpush1.msra.mxu0 %v530
    %1494 = vmatprep.subr.mxu0 %v539
    %1495 = vmatpush1.msra.mxu0 %v538
    %1496 = vmatprep.subr.mxu0 %v547
    %1497 = vmatpush1.msra.mxu0 %v546
    %1498 = vmatprep.subr.mxu0 %v555
    %1499 = vmatpush1.msra.mxu0 %v554
    %1500 = vmatprep.subr.mxu0 %v563
    %1501 = vmatpush1.msra.mxu0 %v562
    %1502 = vmatprep.subr.mxu0 %v571
    %1503 = vmatpush1.msra.mxu0 %v570
    %1504 = vmatprep.subr.mxu0 %v579
    %1505 = vmatpush1.msra.mxu0 %v578
    %1506 = vmatprep.subr.mxu0 %v587
    %1507 = vmatpush1.msra.mxu0 %v586
    %1508 = vmatprep.subr.mxu0 %v595
    %1509 = vmatpush1.msra.mxu0 %v594
    %1510 = vmatprep.subr.mxu0 %v603
    %1511 = vmatpush1.msra.mxu0 %v602
    %1512 = vmatprep.subr.mxu0 %v611
    %1513 = vmatpush1.msra.mxu0 %v610
    %1514 = vmatprep.subr.mxu0 %v619
    %1515 = vmatpush1.msra.mxu0 %v618
    %1516 = vmatprep.subr.mxu0 %v627
    %1517 = vmatpush1.msra.mxu0 %v626
    %1518 = vmatprep.subr.mxu0 %v635
    %1519 = vmatpush1.msra.mxu0 %v634
    %1520 = vmatprep.subr.mxu0 %v643
    %1521 = vmatpush1.msra.mxu0 %v642
    %1522 = vmatprep.subr.mxu0 %v651
    %1523 = vmatpush1.msra.mxu0 %v650
    %1524 = vmatprep.subr.mxu0 %v659
    %1525 = vmatpush1.msra.mxu0 %v658
    %1526 = vmatprep.subr.mxu0 %v667
    %1527 = vmatpush1.msra.mxu0 %v666
    %1528 = vmatprep.subr.mxu0 %v675
    %1529 = vmatpush1.msra.mxu0 %v674
    %1530 = vmatprep.subr.mxu0 %v683
    %1531 = vmatpush1.msra.mxu0 %v682
    %1532 = vmatprep.subr.mxu0 %v691
    %1533 = vmatpush1.msra.mxu0 %v690
    %1534 = vmatprep.subr.mxu0 %v699
    %1535 = vmatpush1.msra.mxu0 %v698
    %1536 = vmatprep.subr.mxu0 %v707
    %1537 = vmatpush1.msra.mxu0 %v706
    %1538 = vmatprep.subr.mxu0 %v715
    %1539 = vmatpush1.msra.mxu0 %v714
    %1540 = vmatprep.mubr.f32.mxu0 %v453
    %1541 = vmatmul.mubr.f32.gmra.mrb[0].mxu0 %v452
    %v1542 = vpop.f32.mrb[0].mxu0
    %v1543 = vadd.f32 %v1001, %v1542
    %v1544 = vpop.f32.mrb[0].mxu0
    %v1545 = vadd.f32 %v1005, %v1544
    %1546 = vmatprep.mubr.f32.mxu0 %v457
    %1547 = vmatmul.mubr.f32.gmra.mrb[0].mxu0 %v456
    %v1548 = vpop.f32.mrb[0].mxu0
    %v1549 = vadd.f32 %v1001, %v1548
    %v1550 = vpop.f32.mrb[0].mxu0
    %v1551 = vadd.f32 %v1005, %v1550
    %1552 = vdwg.mxu0
    %1553 = vmatprep.subr.mxu0 %v723
    %1554 = vmatpush1.msra.mxu0 %v722
    %1555 = vmatprep.subr.mxu0 %v731
    %1556 = vmatpush1.msra.mxu0 %v730
    %1557 = vmatprep.subr.mxu0 %v739
    %1558 = vmatpush1.msra.mxu0 %v738
    %1559 = vmatprep.subr.mxu0 %v747
    %1560 = vmatpush1.msra.mxu0 %v746
    %1561 = vmatprep.subr.mxu0 %v755
    %1562 = vmatpush1.msra.mxu0 %v754
    %1563 = vmatprep.subr.mxu0 %v763
    %1564 = vmatpush1.msra.mxu0 %v762
    %1565 = vmatprep.subr.mxu0 %v771
    %1566 = vmatpush1.msra.mxu0 %v770
    %1567 = vmatprep.subr.mxu0 %v779
    %1568 = vmatpush1.msra.mxu0 %v778
    %1569 = vmatprep.subr.mxu0 %v787
    %1570 = vmatpush1.msra.mxu0 %v786
    %1571 = vmatprep.subr.mxu0 %v795
    %1572 = vmatpush1.msra.mxu0 %v794
    %1573 = vmatprep.subr.mxu0 %v803
    %1574 = vmatpush1.msra.mxu0 %v802
    %1575 = vmatprep.subr.mxu0 %v811
    %1576 = vmatpush1.msra.mxu0 %v810
    %1577 = vmatprep.subr.mxu0 %v819
    %1578 = vmatpush1.msra.mxu0 %v818
    %1579 = vmatprep.subr.mxu0 %v827
    %1580 = vmatpush1.msra.mxu0 %v826
    %1581 = vmatprep.subr.mxu0 %v835
    %1582 = vmatpush1.msra.mxu0 %v834
    %1583 = vmatprep.subr.mxu0 %v843
    %1584 = vmatpush1.msra.mxu0 %v842
    %1585 = vmatprep.subr.mxu0 %v851
    %1586 = vmatpush1.msra.mxu0 %v850
    %1587 = vmatprep.subr.mxu0 %v859
    %1588 = vmatpush1.msra.mxu0 %v858
    %1589 = vmatprep.subr.mxu0 %v867
    %1590 = vmatpush1.msra.mxu0 %v866
    %1591 = vmatprep.subr.mxu0 %v875
    %1592 = vmatpush1.msra.mxu0 %v874
    %1593 = vmatprep.subr.mxu0 %v883
    %1594 = vmatpush1.msra.mxu0 %v882
    %1595 = vmatprep.subr.mxu0 %v891
    %1596 = vmatpush1.msra.mxu0 %v890
    %1597 = vmatprep.subr.mxu0 %v899
    %1598 = vmatpush1.msra.mxu0 %v898
    %1599 = vmatprep.subr.mxu0 %v907
    %1600 = vmatpush1.msra.mxu0 %v906
    %1601 = vmatprep.subr.mxu0 %v915
    %1602 = vmatpush1.msra.mxu0 %v914
    %1603 = vmatprep.subr.mxu0 %v923
    %1604 = vmatpush1.msra.mxu0 %v922
    %1605 = vmatprep.subr.mxu0 %v931
    %1606 = vmatpush1.msra.mxu0 %v930
    %1607 = vmatprep.subr.mxu0 %v939
    %1608 = vmatpush1.msra.mxu0 %v938
    %1609 = vmatprep.subr.mxu0 %v947
    %1610 = vmatpush1.msra.mxu0 %v946
    %1611 = vmatprep.subr.mxu0 %v955
    %1612 = vmatpush1.msra.mxu0 %v954
    %1613 = vmatprep.subr.mxu0 %v963
    %1614 = vmatpush1.msra.mxu0 %v962
    %1615 = vmatprep.subr.mxu0 %v971
    %1616 = vmatpush1.msra.mxu0 %v970
    %1617 = vmatprep.mubr.f32.mxu0 %v455
    %1618 = vmatmul.mubr.f32.gmra.mrb[0].mxu0 %v454
    %v1619 = vpop.f32.mrb[0].mxu0
    %v1620 = vadd.f32 %v1543, %v1619
    %v1621 = vpop.f32.mrb[0].mxu0
    %v1622 = vadd.f32 %v1545, %v1621
    %1623 = vmatprep.mubr.f32.mxu0 %v459
    %1624 = vmatmul.mubr.f32.gmra.mrb[0].mxu0 %v458
    %v1625 = vpop.f32.mrb[0].mxu0
    %v1626 = vadd.f32 %v1549, %v1625
    %v1627 = vpop.f32.mrb[0].mxu0
    %v1628 = vadd.f32 %v1551, %v1627
    %1629 = vdwg.mxu0
    %v1630 = vtanh.pop %v1158
    %v1631 = vtanh.pop %v1160
    %v1632 = vtanh.pop %v1312
    %v1633 = vtanh.pop %v1314
    %v1634 = vtanh.pop %v1164
    %v1635 = vtanh.pop %v1166
    %v1636 = vtanh.pop %v1318
    %v1637 = vtanh.pop %v1320
    %v1638 = vrot.slane %v1630, 4
    %v1639 = vmax.f32 %v1630, %v1638
    %v1640 = vrot.slane %v1639, 2
    %v1641 = vmax.f32 %v1639, %v1640
    %v1642 = vrot.slane %v1641, 1
    %v1643 = vmax.f32 %v1641, %v1642
    %v1644 = vrot.slane %v1631, 4
    %v1645 = vmax.f32 %v1631, %v1644
    %v1646 = vrot.slane %v1645, 2
    %v1647 = vmax.f32 %v1645, %v1646
    %v1648 = vrot.slane %v1647, 1
    %v1649 = vmax.f32 %v1647, %v1648
    %v1650 = vrot.slane %v1632, 4
    %v1651 = vmax.f32 %v1632, %v1650
    %v1652 = vrot.slane %v1651, 2
    %v1653 = vmax.f32 %v1651, %v1652
    %v1654 = vrot.slane %v1653, 1
    %v1655 = vmax.f32 %v1653, %v1654
    %v1656 = vrot.slane %v1633, 4
    %v1657 = vmax.f32 %v1633, %v1656
    %v1658 = vrot.slane %v1657, 2
    %v1659 = vmax.f32 %v1657, %v1658
    %v1660 = vrot.slane %v1659, 1
    %v1661 = vmax.f32 %v1659, %v1660
    %v1662 = vrot.slane %v1634, 4
    %v1663 = vmax.f32 %v1634, %v1662
    %v1664 = vrot.slane %v1663, 2
    %v1665 = vmax.f32 %v1663, %v1664
    %v1666 = vrot.slane %v1665, 1
    %v1667 = vmax.f32 %v1665, %v1666
    %v1668 = vrot.slane %v1635, 4
    %v1669 = vmax.f32 %v1635, %v1668
    %v1670 = vrot.slane %v1669, 2
    %v1671 = vmax.f32 %v1669, %v1670
    %v1672 = vrot.slane %v1671, 1
    %v1673 = vmax.f32 %v1671, %v1672
    %v1674 = vrot.slane %v1636, 4
    %v1675 = vmax.f32 %v1636, %v1674
    %v1676 = vrot.slane %v1675, 2
    %v1677 = vmax.f32 %v1675, %v1676
    %v1678 = vrot.slane %v1677, 1
    %v1679 = vmax.f32 %v1677, %v1678
    %v1680 = vrot.slane %v1637, 4
    %v1681 = vmax.f32 %v1637, %v1680
    %v1682 = vrot.slane %v1681, 2
    %v1683 = vmax.f32 %v1681, %v1682
    %v1684 = vrot.slane %v1683, 1
    %v1685 = vmax.f32 %v1683, %v1684
    %v1686 = vsub.f32 %v1630, %v1643
    %v1687 = vsub.f32 %v1631, %v1649
    %v1688 = vsub.f32 %v1632, %v1655
    %v1689 = vsub.f32 %v1633, %v1661
    %v1690 = vsub.f32 %v1634, %v1667
    %v1691 = vsub.f32 %v1635, %v1673
    %v1692 = vsub.f32 %v1636, %v1679
    %v1693 = vsub.f32 %v1637, %v1685
    %v1694 = vmul.f32 %v1686, 1.442695
    %v1695 = vpow.pop %v1694
    %v1696 = vmul.f32 %v1687, 1.442695
    %v1697 = vpow.pop %v1696
    %v1698 = vmul.f32 %v1688, 1.442695
    %v1699 = vpow.pop %v1698
    %v1700 = vmul.f32 %v1689, 1.442695
    %v1701 = vpow.pop %v1700
    %v1702 = vmul.f32 %v1690, 1.442695
    %v1703 = vpow.pop %v1702
    %v1704 = vmul.f32 %v1691, 1.442695
    %v1705 = vpow.pop %v1704
    %v1706 = vmul.f32 %v1692, 1.442695
    %v1707 = vpow.pop %v1706
    %v1708 = vmul.f32 %v1693, 1.442695
    %v1709 = vpow.pop %v1708
    %v1710 = vrot.slane %v1695, 4
    %v1711 = vadd.f32 %v1695, %v1710
    %v1712 = vrot.slane %v1711, 2
    %v1713 = vadd.f32 %v1711, %v1712
    %v1714 = vrot.slane %v1713, 1
    %v1715 = vadd.f32 %v1713, %v1714
    %v1716 = vrot.slane %v1697, 4
    %v1717 = vadd.f32 %v1697, %v1716
    %v1718 = vrot.slane %v1717, 2
    %v1719 = vadd.f32 %v1717, %v1718
    %v1720 = vrot.slane %v1719, 1
    %v1721 = vadd.f32 %v1719, %v1720
    %v1722 = vrot.slane %v1699, 4
    %v1723 = vadd.f32 %v1699, %v1722
    %v1724 = vrot.slane %v1723, 2
    %v1725 = vadd.f32 %v1723, %v1724
    %v1726 = vrot.slane %v1725, 1
    %v1727 = vadd.f32 %v1725, %v1726
    %v1728 = vrot.slane %v1701, 4
    %v1729 = vadd.f32 %v1701, %v1728
    %v1730 = vrot.slane %v1729, 2
    %v1731 = vadd.f32 %v1729, %v1730
    %v1732 = vrot.slane %v1731, 1
    %v1733 = vadd.f32 %v1731, %v1732
    %v1734 = vrot.slane %v1703, 4
    %v1735 = vadd.f32 %v1703, %v1734
    %v1736 = vrot.slane %v1735, 2
    %v1737 = vadd.f32 %v1735, %v1736
    %v1738 = vrot.slane %v1737, 1
    %v1739 = vadd.f32 %v1737, %v1738
    %v1740 = vrot.slane %v1705, 4
    %v1741 = vadd.f32 %v1705, %v1740
    %v1742 = vrot.slane %v1741, 2
    %v1743 = vadd.f32 %v1741, %v1742
    %v1744 = vrot.slane %v1743, 1
    %v1745 = vadd.f32 %v1743, %v1744
    %v1746 = vrot.slane %v1707, 4
    %v1747 = vadd.f32 %v1707, %v1746
    %v1748 = vrot.slane %v1747, 2
    %v1749 = vadd.f32 %v1747, %v1748
    %v1750 = vrot.slane %v1749, 1
    %v1751 = vadd.f32 %v1749, %v1750
    %v1752 = vrot.slane %v1709, 4
    %v1753 = vadd.f32 %v1709, %v1752
    %v1754 = vrot.slane %v1753, 2
    %v1755 = vadd.f32 %v1753, %v1754
    %v1756 = vrot.slane %v1755, 1
    %v1757 = vadd.f32 %v1755, %v1756
    %v1758 = vrcp.pop %v1715
    %v1759 = vrcp.pop %v1721
    %v1760 = vrcp.pop %v1727
    %v1761 = vrcp.pop %v1733
    %v1762 = vrcp.pop %v1739
    %v1763 = vrcp.pop %v1745
    %v1764 = vrcp.pop %v1751
    %v1765 = vrcp.pop %v1757
    %v1766 = vmul.f32 %v1695, %v1758
    %v1767 = vmul.f32 %v1697, %v1759
    %v1768 = vmul.f32 %v1699, %v1760
    %v1769 = vmul.f32 %v1701, %v1761
    %v1770 = vmul.f32 %v1703, %v1762
    %v1771 = vmul.f32 %v1705, %v1763
    %v1772 = vmul.f32 %v1707, %v1764
    %v1773 = vmul.f32 %v1709, %v1765
    %v1774 = vxor.u32 %v1466, 2147483648
    %v1775 = vxor.u32 %v1468, 2147483648
    %v1776 = vxor.u32 %v1620, 2147483648
    %v1777 = vxor.u32 %v1622, 2147483648
    %v1778 = vxor.u32 %v1472, 2147483648
    %v1779 = vxor.u32 %v1474, 2147483648
    %v1780 = vxor.u32 %v1626, 2147483648
    %v1781 = vxor.u32 %v1628, 2147483648
    %v1782 = vmul.f32 %v1774, 1.442695
    %v1783 = vpow.pop %v1782
    %v1784 = vmul.f32 %v1775, 1.442695
    %v1785 = vpow.pop %v1784
    %v1786 = vmul.f32 %v1776, 1.442695
    %v1787 = vpow.pop %v1786
    %v1788 = vmul.f32 %v1777, 1.442695
    %v1789 = vpow.pop %v1788
    %v1790 = vmul.f32 %v1778, 1.442695
    %v1791 = vpow.pop %v1790
    %v1792 = vmul.f32 %v1779, 1.442695
    %v1793 = vpow.pop %v1792
    %v1794 = vmul.f32 %v1780, 1.442695
    %v1795 = vpow.pop %v1794
    %v1796 = vmul.f32 %v1781, 1.442695
    %v1797 = vpow.pop %v1796
    %v1798 = vadd.f32 %v1783, 1.0
    %v1799 = vadd.f32 %v1785, 1.0
    %v1800 = vadd.f32 %v1787, 1.0
    %v1801 = vadd.f32 %v1789, 1.0
    %v1802 = vadd.f32 %v1791, 1.0
    %v1803 = vadd.f32 %v1793, 1.0
    %v1804 = vadd.f32 %v1795, 1.0
    %v1805 = vadd.f32 %v1797, 1.0
    %v1806 = vrcp.pop %v1798
    %v1807 = vmul.f32 1.0, %v1806
    %v1808 = vrcp.pop %v1799
    %v1809 = vmul.f32 1.0, %v1808
    %v1810 = vrcp.pop %v1800
    %v1811 = vmul.f32 1.0, %v1810
    %v1812 = vrcp.pop %v1801
    %v1813 = vmul.f32 1.0, %v1812
    %v1814 = vrcp.pop %v1802
    %v1815 = vmul.f32 1.0, %v1814
    %v1816 = vrcp.pop %v1803
    %v1817 = vmul.f32 1.0, %v1816
    %v1818 = vrcp.pop %v1804
    %v1819 = vmul.f32 1.0, %v1818
    %v1820 = vrcp.pop %v1805
    %v1821 = vmul.f32 1.0, %v1820
    %v1822 = vmul.f32 %v1807, %v1766
    %v1823 = vmul.f32 %v1809, %v1767
    %v1824 = vmul.f32 %v1811, %v1768
    %v1825 = vmul.f32 %v1813, %v1769
    %v1826 = vmul.f32 %v1815, %v1770
    %v1827 = vmul.f32 %v1817, %v1771
    %v1828 = vmul.f32 %v1819, %v1772
    %v1829 = vmul.f32 %v1821, %v1773
    %v1830 = vrot.slane %v1822, 4
    %v1831 = vadd.f32 %v1822, %v1830
    %v1832 = vrot.slane %v1831, 2
    %v1833 = vadd.f32 %v1831, %v1832
    %v1834 = vrot.slane %v1833, 1
    %v1835 = vadd.f32 %v1833, %v1834
    %v1836 = vrot.slane %v1823, 4
    %v1837 = vadd.f32 %v1823, %v1836
    %v1838 = vrot.slane %v1837, 2
    %v1839 = vadd.f32 %v1837, %v1838
    %v1840 = vrot.slane %v1839, 1
    %v1841 = vadd.f32 %v1839, %v1840
    %v1842 = vrot.slane %v1824, 4
    %v1843 = vadd.f32 %v1824, %v1842
    %v1844 = vrot.slane %v1843, 2
    %v1845 = vadd.f32 %v1843, %v1844
    %v1846 = vrot.slane %v1845, 1
    %v1847 = vadd.f32 %v1845, %v1846
    %v1848 = vrot.slane %v1825, 4
    %v1849 = vadd.f32 %v1825, %v1848
    %v1850 = vrot.slane %v1849, 2
    %v1851 = vadd.f32 %v1849, %v1850
    %v1852 = vrot.slane %v1851, 1
    %v1853 = vadd.f32 %v1851, %v1852
    %v1854 = vrot.slane %v1826, 4
    %v1855 = vadd.f32 %v1826, %v1854
    %v1856 = vrot.slane %v1855, 2
    %v1857 = vadd.f32 %v1855, %v1856
    %v1858 = vrot.slane %v1857, 1
    %v1859 = vadd.f32 %v1857, %v1858
    %v1860 = vrot.slane %v1827, 4
    %v1861 = vadd.f32 %v1827, %v1860
    %v1862 = vrot.slane %v1861, 2
    %v1863 = vadd.f32 %v1861, %v1862
    %v1864 = vrot.slane %v1863, 1
    %v1865 = vadd.f32 %v1863, %v1864
    %v1866 = vrot.slane %v1828, 4
    %v1867 = vadd.f32 %v1828, %v1866
    %v1868 = vrot.slane %v1867, 2
    %v1869 = vadd.f32 %v1867, %v1868
    %v1870 = vrot.slane %v1869, 1
    %v1871 = vadd.f32 %v1869, %v1870
    %v1872 = vrot.slane %v1829, 4
    %v1873 = vadd.f32 %v1829, %v1872
    %v1874 = vrot.slane %v1873, 2
    %v1875 = vadd.f32 %v1873, %v1874
    %v1876 = vrot.slane %v1875, 1
    %v1877 = vadd.f32 %v1875, %v1876
    %v1886 = vcombine.low %v1835, %v1841
    %v1887 = vcombine.low %v1847, %v1853
    %v1889 = vunpack.c.l.s4 1966171168
    %v1890 = vunpack.c.0.s8 %v1889
    %v1891 = vlaneseq
    %v1892 = vshrl.u32 %v1891, 7
    %v1893 = vsub.s32 %v1890, %v1892
    %v1894 = vrot.slane %v1886, %v1893
    %v1896 = vunpack.c.l.s4 1966171168
    %v1897 = vunpack.c.0.s8 %v1896
    %v1898 = vlaneseq
    %v1899 = vshrl.u32 %v1898, 7
    %v1900 = vsub.s32 %v1897, %v1899
    %v1901 = vrot.slane %v1887, %v1900
    %v1902 = vcombine.low %v1894, %v1901
    %v1904 = vunpack.c.l.s4 1966171168
    %v1905 = vunpack.c.0.s8 %v1904
    %v1906 = vlaneseq
    %v1907 = vshrl.u32 %v1906, 7
    %v1908 = vsub.s32 %v1905, %v1907
    %v1909 = vrot.slane %v1902, %v1908
    %v1910 = vcombine.low %v1859, %v1865
    %v1911 = vcombine.low %v1871, %v1877
    %v1913 = vunpack.c.l.s4 1966171168
    %v1914 = vunpack.c.0.s8 %v1913
    %v1915 = vlaneseq
    %v1916 = vshrl.u32 %v1915, 7
    %v1917 = vsub.s32 %v1914, %v1916
    %v1918 = vrot.slane %v1910, %v1917
    %v1920 = vunpack.c.l.s4 1966171168
    %v1921 = vunpack.c.0.s8 %v1920
    %v1922 = vlaneseq
    %v1923 = vshrl.u32 %v1922, 7
    %v1924 = vsub.s32 %v1921, %v1923
    %v1925 = vrot.slane %v1911, %v1924
    %v1926 = vcombine.low %v1918, %v1925
    %v1928 = vunpack.c.l.s4 1966171168
    %v1929 = vunpack.c.0.s8 %v1928
    %v1930 = vlaneseq
    %v1931 = vshrl.u32 %v1930, 7
    %v1932 = vsub.s32 %v1929, %v1931
    %v1933 = vrot.slane %v1926, %v1932
    %v1936 = vlaneseq
    %vm1937 = vcmp.ge.s32.totalorder %v1936, 0
    %vm1938 = vcmp.lt.s32.totalorder %v1936, 512
    %vm1939 = vmand %vm1937, %vm1938
    %1940 = vst.msk [vmem:[#allocation13] sm:$0xf] %vm1939, %v1909
    %1941 = vst.msk [vmem:[#allocation13 + $0x4] sm:$0xf] %vm1939, %v1933
    %v1942 = vmul.f32 %v1466, %v1766
    %v1943 = vmul.f32 %v1468, %v1767
    %v1944 = vmul.f32 %v1620, %v1768
    %v1945 = vmul.f32 %v1622, %v1769
    %v1946 = vmul.f32 %v1472, %v1770
    %v1947 = vmul.f32 %v1474, %v1771
    %v1948 = vmul.f32 %v1626, %v1772
    %v1949 = vmul.f32 %v1628, %v1773
    %v1950 = vrot.slane %v1942, 4
    %v1951 = vadd.f32 %v1942, %v1950
    %v1952 = vrot.slane %v1951, 2
    %v1953 = vadd.f32 %v1951, %v1952
    %v1954 = vrot.slane %v1953, 1
    %v1955 = vadd.f32 %v1953, %v1954
    %v1956 = vrot.slane %v1943, 4
    %v1957 = vadd.f32 %v1943, %v1956
    %v1958 = vrot.slane %v1957, 2
    %v1959 = vadd.f32 %v1957, %v1958
    %v1960 = vrot.slane %v1959, 1
    %v1961 = vadd.f32 %v1959, %v1960
    %v1962 = vrot.slane %v1944, 4
    %v1963 = vadd.f32 %v1944, %v1962
    %v1964 = vrot.slane %v1963, 2
    %v1965 = vadd.f32 %v1963, %v1964
    %v1966 = vrot.slane %v1965, 1
    %v1967 = vadd.f32 %v1965, %v1966
    %v1968 = vrot.slane %v1945, 4
    %v1969 = vadd.f32 %v1945, %v1968
    %v1970 = vrot.slane %v1969, 2
    %v1971 = vadd.f32 %v1969, %v1970
    %v1972 = vrot.slane %v1971, 1
    %v1973 = vadd.f32 %v1971, %v1972
    %v1974 = vrot.slane %v1946, 4
    %v1975 = vadd.f32 %v1946, %v1974
    %v1976 = vrot.slane %v1975, 2
    %v1977 = vadd.f32 %v1975, %v1976
    %v1978 = vrot.slane %v1977, 1
    %v1979 = vadd.f32 %v1977, %v1978
    %v1980 = vrot.slane %v1947, 4
    %v1981 = vadd.f32 %v1947, %v1980
    %v1982 = vrot.slane %v1981, 2
    %v1983 = vadd.f32 %v1981, %v1982
    %v1984 = vrot.slane %v1983, 1
    %v1985 = vadd.f32 %v1983, %v1984
    %v1986 = vrot.slane %v1948, 4
    %v1987 = vadd.f32 %v1948, %v1986
    %v1988 = vrot.slane %v1987, 2
    %v1989 = vadd.f32 %v1987, %v1988
    %v1990 = vrot.slane %v1989, 1
    %v1991 = vadd.f32 %v1989, %v1990
    %v1992 = vrot.slane %v1949, 4
    %v1993 = vadd.f32 %v1949, %v1992
    %v1994 = vrot.slane %v1993, 2
    %v1995 = vadd.f32 %v1993, %v1994
    %v1996 = vrot.slane %v1995, 1
    %v1997 = vadd.f32 %v1995, %v1996
    %v2006 = vcombine.low %v1955, %v1961
    %v2007 = vcombine.low %v1967, %v1973
    %v2009 = vunpack.c.l.s4 1966171168
    %v2010 = vunpack.c.0.s8 %v2009
    %v2011 = vlaneseq
    %v2012 = vshrl.u32 %v2011, 7
    %v2013 = vsub.s32 %v2010, %v2012
    %v2014 = vrot.slane %v2006, %v2013
    %v2016 = vunpack.c.l.s4 1966171168
    %v2017 = vunpack.c.0.s8 %v2016
    %v2018 = vlaneseq
    %v2019 = vshrl.u32 %v2018, 7
    %v2020 = vsub.s32 %v2017, %v2019
    %v2021 = vrot.slane %v2007, %v2020
    %v2022 = vcombine.low %v2014, %v2021
    %v2024 = vunpack.c.l.s4 1966171168
    %v2025 = vunpack.c.0.s8 %v2024
    %v2026 = vlaneseq
    %v2027 = vshrl.u32 %v2026, 7
    %v2028 = vsub.s32 %v2025, %v2027
    %v2029 = vrot.slane %v2022, %v2028
    %v2030 = vcombine.low %v1979, %v1985
    %v2031 = vcombine.low %v1991, %v1997
    %v2033 = vunpack.c.l.s4 1966171168
    %v2034 = vunpack.c.0.s8 %v2033
    %v2035 = vlaneseq
    %v2036 = vshrl.u32 %v2035, 7
    %v2037 = vsub.s32 %v2034, %v2036
    %v2038 = vrot.slane %v2030, %v2037
    %v2040 = vunpack.c.l.s4 1966171168
    %v2041 = vunpack.c.0.s8 %v2040
    %v2042 = vlaneseq
    %v2043 = vshrl.u32 %v2042, 7
    %v2044 = vsub.s32 %v2041, %v2043
    %v2045 = vrot.slane %v2031, %v2044
    %v2046 = vcombine.low %v2038, %v2045
    %v2048 = vunpack.c.l.s4 1966171168
    %v2049 = vunpack.c.0.s8 %v2048
    %v2050 = vlaneseq
    %v2051 = vshrl.u32 %v2050, 7
    %v2052 = vsub.s32 %v2049, %v2051
    %v2053 = vrot.slane %v2046, %v2052
    %2056 = vst.msk [vmem:[#allocation12] sm:$0xf] %vm1939, %v2029
    %2057 = vst.msk [vmem:[#allocation12 + $0x4] sm:$0xf] %vm1939, %v2053
    %2058 = vst [vmem:[#allocation15] sm:$0xff] %v1466
    %2059 = vst [vmem:[#allocation15 + $0x8] sm:$0xff] %v1468
    %2060 = vst [vmem:[#allocation15 + $0x10] sm:$0xff] %v1620
    %2061 = vst [vmem:[#allocation15 + $0x18] sm:$0xff] %v1622
    %2062 = vst [vmem:[#allocation15 + $0x20] sm:$0xff] %v1472
    %2063 = vst [vmem:[#allocation15 + $0x28] sm:$0xff] %v1474
    %2064 = vst [vmem:[#allocation15 + $0x30] sm:$0xff] %v1626
    %2065 = vst [vmem:[#allocation15 + $0x38] sm:$0xff] %v1628
    %2066 = vst [vmem:[#allocation16] sm:$0xff] %v1630
    %2067 = vst [vmem:[#allocation16 + $0x8] sm:$0xff] %v1631
    %2068 = vst [vmem:[#allocation16 + $0x10] sm:$0xff] %v1632
    %2069 = vst [vmem:[#allocation16 + $0x18] sm:$0xff] %v1633
    %2070 = vst [vmem:[#allocation16 + $0x20] sm:$0xff] %v1634
    %2071 = vst [vmem:[#allocation16 + $0x28] sm:$0xff] %v1635
    %2072 = vst [vmem:[#allocation16 + $0x30] sm:$0xff] %v1636
    %2073 = vst [vmem:[#allocation16 + $0x38] sm:$0xff] %v1637
    // Predicated region
    $region46: #{tpu_custom_call.1} parent=1 // pred_check
      _
    $region47: #{tpu_custom_call.1} parent=1 // pred_check_branch
      %2075 = sbr.rel (0) target = $region49
    $region48: #{tpu_custom_call.1} parent=1 // pred_region
      %s2077 = ssub.s32 128, 128
      %2078 = vsyncadd [#allocation5], %s2077
      %s2079 = sshll.u32 [#allocation12], 4
      %s2080 = int_to_ptr.vmem [resolvable:$true] %s2079
      %2085 = dma.vmem_to_hbm [thread:$0]  %s2080, 128, %s6, [#allocation5], 64, 64, 4
    $region49: #{tpu_custom_call.1} parent=1 // pred_fallthru
      _
    // Predicated region
    $region50: #{tpu_custom_call.1} parent=1 // pred_check
      _
    $region51: #{tpu_custom_call.1} parent=1 // pred_check_branch
      %2087 = sbr.rel (0) target = $region53
    $region52: #{tpu_custom_call.1} parent=1 // pred_region
      %s2089 = ssub.s32 128, 128
      %2090 = vsyncadd [#allocation14], %s2089
      %s2091 = sshll.u32 [#allocation13], 4
      %s2092 = int_to_ptr.vmem [resolvable:$true] %s2091
      %2097 = dma.vmem_to_hbm [thread:$0]  %s2092, 128, %s7, [#allocation14], 64, 64, 4
    $region53: #{tpu_custom_call.1} parent=1 // pred_fallthru
      _
    // Predicated region
    $region54: #{tpu_custom_call.1} parent=1 // pred_check
      _
    $region55: #{tpu_custom_call.1} parent=1 // pred_check_branch
      %2099 = sbr.rel (0) target = $region57
    $region56: #{tpu_custom_call.1} parent=1 // pred_region
      %s2101 = ssub.s32 1024, 1024
      %2102 = vsyncadd [#allocation14], %s2101
      %s2103 = sshll.u32 [#allocation15], 4
      %s2104 = int_to_ptr.vmem [resolvable:$true] %s2103
      %2109 = dma.vmem_to_hbm [thread:$0]  %s2104, 1024, %s8, [#allocation14], 512, 512, 32
    $region57: #{tpu_custom_call.1} parent=1 // pred_fallthru
      _
    // Predicated region
    $region58: #{tpu_custom_call.1} parent=1 // pred_check
      _
    $region59: #{tpu_custom_call.1} parent=1 // pred_check_branch
      %2111 = sbr.rel (0) target = $region61
    $region60: #{tpu_custom_call.1} parent=1 // pred_region
      %s2113 = ssub.s32 1024, 1024
      %2114 = vsyncadd [#allocation17], %s2113
      %s2115 = sshll.u32 [#allocation16], 4
      %s2116 = int_to_ptr.vmem [resolvable:$true] %s2115
      %2121 = dma.vmem_to_hbm [thread:$0]  %s2116, 1024, %s9, [#allocation17], 512, 512, 32
    $region61: #{tpu_custom_call.1} parent=1 // pred_fallthru
      _
    // Predicated region
    $region62: #{tpu_custom_call.1} parent=1 // pred_check
      _
    $region63: #{tpu_custom_call.1} parent=1 // pred_check_branch
      %2123 = sbr.rel (0) target = $region65
    $region64: #{tpu_custom_call.1} parent=1 // pred_region
      %2124 = dma.done [#allocation5], 128
    $region65: #{tpu_custom_call.1} parent=1 // pred_fallthru
      _
    // Predicated region
    $region66: #{tpu_custom_call.1} parent=1 // pred_check
      _
    $region67: #{tpu_custom_call.1} parent=1 // pred_check_branch
      %2126 = sbr.rel (0) target = $region69
    $region68: #{tpu_custom_call.1} parent=1 // pred_region
      %2127 = dma.done [#allocation14], 128
    $region69: #{tpu_custom_call.1} parent=1 // pred_fallthru
      _
    // Predicated region
    $region70: #{tpu_custom_call.1} parent=1 // pred_check
      _
    $region71: #{tpu_custom_call.1} parent=1 // pred_check_branch
      %2129 = sbr.rel (0) target = $region73
    $region72: #{tpu_custom_call.1} parent=1 // pred_region
      %2130 = dma.done [#allocation14], 1024
    $region73: #{tpu_custom_call.1} parent=1 // pred_fallthru
      _
    // Predicated region
    $region74: #{tpu_custom_call.1} parent=1 // pred_check
      _
    $region75: #{tpu_custom_call.1} parent=1 // pred_check_branch
      %2132 = sbr.rel (0) target = $region77
    $region76: #{tpu_custom_call.1} parent=1 // pred_region
      %2133 = dma.done [#allocation17], 1024
    $region77: #{tpu_custom_call.1} parent=1 // pred_fallthru
      _
    %2134 = vsyncpa [#allocation4], 1
    %2135 = vsyncpa [#allocation7], 1
    %2136 = vsyncpa [#allocation10], 1
    %2137 = vsyncpa [#allocation5], 1
    %2138 = vsyncpa [#allocation14], 1
    %2139 = vsyncpa [#allocation17], 1

</llo_original>
